<compile_context>
chip_gen: v7x
topology: tpu7x:2x2x1
jax: 0.10.0
libtpu: 0.0.40
codegen_flags: <defaults>
</compile_context>

<pallas_src>
import math
import functools

import jax
import jax.numpy as jnp
from jax import lax
from jax.experimental import pallas as pl
from jax.experimental.pallas import tpu as pltpu


def _encoder_layer_kernel(heads, d_k, d_model, ckv, n_kv_chunks,
                          xq_ref, xkv_ref,
                          wq_ref, bq_ref, wkv_ref, bkv_ref,
                          wo_ref, bo_ref,
                          g1_ref, beta1_ref,
                          w1_ref, b1_ref, w2_ref, b2_ref,
                          g2_ref, beta2_ref,
                          out_ref,
                          kv_scratch, ho_scratch):
    eps = 1e-5
    D = d_model
    f32 = jnp.float32
    bf16 = jnp.bfloat16
    qi = pl.program_id(1)

    # ---- K/V projection: once per batch element, chunked over S so the live
    # f32 intermediate is only (CKV, 2D); results cached in VMEM as bf16. -----
    @pl.when(qi == 0)
    def _():
        for c in range(n_kv_chunks):
            lo = c * ckv
            xs = xkv_ref[0, lo:lo + ckv, :]                            # (CKV, D) bf16
            kv = jnp.dot(xs, wkv_ref[...],
                         preferred_element_type=f32) + bkv_ref[...]    # (CKV, 2D) f32
            kv_scratch[0, lo:lo + ckv, :] = kv[:, :D].astype(bf16)     # K
            kv_scratch[1, lo:lo + ckv, :] = kv[:, D:].astype(bf16)     # V

    # ---- Q projection for this query tile (1/sqrt(d_k) folded into Wq/bq) ---
    xq = xq_ref[0].astype(f32)                                         # (TQ, D)
    q = jnp.dot(xq.astype(bf16), wq_ref[...],
                preferred_element_type=f32) + bq_ref[...]              # (TQ, D) f32

    k = kv_scratch[0]                                                  # (S, D) bf16
    v = kv_scratch[1]                                                  # (S, D) bf16

    # ---- Multi-head self-attention -------------------------------------------
    # Each head's output is stored at its lane offset in ho_scratch; the output
    # projection is one fused full-depth (K = D) matmul after the loop.
    # TODO(synk): src_mask (masked_fill with -1e9) not wired in; callers must use mask=None.
    # TODO(synk): for large `heads`, switch to lax.fori_loop + pl.ds lane offsets if a
    #   bundle dump shows vreg spilling; the per-head VMEM store already bounds liveness.
    # TODO(synk): if MLIR shows an explicit per-head transpose of kh, cache K transposed
    #   ((D, S) layout) during the qi == 0 projection instead.
    for h in range(heads):
        lo, hi = h * d_k, (h + 1) * d_k
        qh = q[:, lo:hi].astype(bf16)                                  # (TQ, d_k)
        kh = k[:, lo:hi]                                               # (S, d_k)
        vh = v[:, lo:hi]                                               # (S, d_k)
        # Contract the last dims of both operands (q @ k^T); scale already in q.
        s = lax.dot_general(qh, kh, (((1,), (1,)), ((), ())),
                            preferred_element_type=f32)                # (TQ, S)
        s = s - jnp.max(s, axis=-1, keepdims=True)
        # TODO(synk): a bf16 exp would double EUP throughput on v6e/v7x (keep f32 on v5e).
        p = jnp.exp(s)                                                 # (TQ, S) f32
        denom = jnp.sum(p, axis=-1, keepdims=True)                     # (TQ, 1)
        ho = jnp.dot(p.astype(bf16), vh,
                     preferred_element_type=f32)                       # (TQ, d_k)
        # Deferred softmax normalization: scale the small (TQ, d_k) output.
        ho = ho * pl.reciprocal(denom, approx=True)
        ho_scratch[:, lo:hi] = ho.astype(bf16)

    # One full-depth output projection (K = D uses the whole MXU depth).
    attn = jnp.dot(ho_scratch[...], wo_ref[...],
                   preferred_element_type=f32) + bo_ref[...]           # (TQ, D)

    # ---- Residual + LayerNorm 1 (single-pass variance, f32) ------------------
    r1 = xq + attn
    mu1 = jnp.mean(r1, axis=-1, keepdims=True)
    var1 = jnp.maximum(jnp.mean(r1 * r1, axis=-1, keepdims=True) - mu1 * mu1, 0.0)
    out1 = (r1 - mu1) * lax.rsqrt(var1 + eps) * g1_ref[...] + beta1_ref[...]

    # ---- FeedForward (bf16 matmuls, f32 accumulation, ReLU) -------------------
    # TODO(synk): for very large d_ff, tile the FFN over d_ff chunks; on v7x the
    #   W1/W2 weights could additionally be quantized to fp8 for 2x MXU throughput.
    h1 = jnp.dot(out1.astype(bf16), w1_ref[...],
                 preferred_element_type=f32) + b1_ref[...]
    h1 = jnp.maximum(h1, 0.0)
    h2 = jnp.dot(h1.astype(bf16), w2_ref[...],
                 preferred_element_type=f32) + b2_ref[...]

    # ---- Residual + LayerNorm 2 -----------------------------------------------
    r2 = out1 + h2
    mu2 = jnp.mean(r2, axis=-1, keepdims=True)
    var2 = jnp.maximum(jnp.mean(r2 * r2, axis=-1, keepdims=True) - mu2 * mu2, 0.0)
    out2 = (r2 - mu2) * lax.rsqrt(var2 + eps) * g2_ref[...] + beta2_ref[...]

    out_ref[0] = out2.astype(out_ref.dtype)


def _largest_divisor_tile(n, cap):
    for t in (512, 256, 128, 64, 32, 16, 8):
        if t <= cap and n % t == 0:
            return t
    return n  # not a multiple of 8: use the full extent.


def _vmem_capacity_bytes():
    try:
        info = pltpu.get_tpu_info()
        for name in ("vmem_capacity_bytes", "vmem_size_bytes", "vmem_bytes"):
            val = getattr(info, name, None)
            if val:
                return int(val)
    except Exception:
        pass
    return 64 << 20  # conservative (v7x) default


def encoder_layer(x, params, *, heads):
    """x: (N, S, D) float32; params: dict of weights (see init_params)."""
    N, S, D = x.shape
    assert D % heads == 0, "d_model must be divisible by heads"
    d_k = D // heads
    d_ff = params["w1"].shape[1]

    vmem_cap = _vmem_capacity_bytes()
    # v7x (64 MiB physical VMEM): cap the query tile at 128; v5e/v6e (128 MiB): 256.
    tq_cap = 128 if vmem_cap <= (64 << 20) else 256
    TQ = _largest_divisor_tile(S, tq_cap)
    n_q = S // TQ
    CKV = _largest_divisor_tile(S, 512)          # K/V-projection chunk rows
    n_kv = S // CKV

    f32, bf16 = jnp.float32, jnp.bfloat16
    scale = 1.0 / math.sqrt(d_k)

    # Host-side weight prep: fold the softmax scale into Wq/bq, fuse the K/V
    # weights into one matmul, cast matmul weights to bf16 (halves weight
    # VMEM/DMA). Biases / LayerNorm params stay f32.
    wq = (params["wq"] * scale).astype(bf16)
    bq = (params["bq"] * scale).astype(f32)
    wkv = jnp.concatenate([params["wk"], params["wv"]], axis=1).astype(bf16)
    bkv = jnp.concatenate([params["bk"], params["bv"]], axis=1).astype(f32)
    wo = params["wo"].astype(bf16)
    w1 = params["w1"].astype(bf16)
    w2 = params["w2"].astype(bf16)
    bo = params["bo"].astype(f32)
    b1 = params["b1"].astype(f32)
    b2 = params["b2"].astype(f32)
    g1, beta1 = params["gamma1"].astype(f32), params["beta1"].astype(f32)
    g2, beta2 = params["gamma2"].astype(f32), params["beta2"].astype(f32)

    # Full-sequence K/V input pre-cast to bf16 (halves its DMA + VMEM residency);
    # the query-tile input stays f32 for the residual path.
    x_kv = x.astype(bf16)

    def whole(shape):
        # Constant-index-map operand: fetched once, single-buffered.
        return pl.BlockSpec(shape, lambda b, qi: tuple(0 for _ in shape),
                            pipeline_mode=pl.Buffered(1))

    in_specs = [
        pl.BlockSpec((1, TQ, D), lambda b, qi: (b, qi, 0)),   # x (query tile, f32)
        pl.BlockSpec((1, S, D), lambda b, qi: (b, 0, 0)),     # x (full seq, bf16)
        whole((D, D)), whole((1, D)),                         # Wq, bq (pre-scaled)
        whole((D, 2 * D)), whole((1, 2 * D)),                 # Wkv, bkv
        whole((D, D)), whole((1, D)),                         # Wo, bo
        whole((1, D)), whole((1, D)),                         # gamma1, beta1
        whole((D, d_ff)), whole((1, d_ff)),                   # W1, b1
        whole((d_ff, D)), whole((1, D)),                      # W2, b2
        whole((1, D)), whole((1, D)),                         # gamma2, beta2
    ]

    kernel = functools.partial(_encoder_layer_kernel, heads, d_k, D, CKV, n_kv)

    # Advisory cost estimate so XLA does not treat the custom call as free.
    flops = N * (8 * S * D * D + 4 * S * S * D + 4 * S * D * d_ff)
    transcendentals = N * heads * S * S + 4 * N * S
    weight_bytes = sum(int(w.size) * w.dtype.itemsize
                       for w in (wq, wkv, wo, w1, w2, bq, bkv, bo, b1, b2,
                                 g1, beta1, g2, beta2))
    bytes_accessed = int(x.size) * (4 + 2 + 4) + weight_bytes
    cost = pl.CostEstimate(flops=int(flops),
                           transcendentals=int(transcendentals),
                           bytes_accessed=int(bytes_accessed))

    # VMEM budget: single-buffered weights + double-buffered activation tiles
    # + bf16 K/V cache + head-output buffer + main in-kernel transients
    # (score/prob tile, FFN hidden, K/V-projection chunk) + compiler headroom,
    # clamped generation-aware below physical VMEM (~85%).
    act_bytes = (2 * (TQ * D * 4)             # query tile, double buffered
                 + 2 * (TQ * D * 4)           # output tile, double buffered
                 + 2 * (S * D * 2)            # full-seq bf16 input, double buffered
                 + 2 * (S * D * 2)            # K/V cache scratch (bf16)
                 + TQ * D * 2)                # head-output scratch (bf16)
    transient_bytes = (2 * TQ * S * 4         # scores + probabilities (f32)
                       + 2 * TQ * d_ff * 4    # FFN hidden (f32, pre/post ReLU)
                       + CKV * 2 * D * 4)     # K/V projection chunk (f32)
    needed = weight_bytes + act_bytes + transient_bytes + (8 << 20)
    vmem_limit = int(min(max(needed, 32 << 20), int(vmem_cap * 0.85)))

    # TODO(synk): for N == 1 on v7x (2 TensorCores), hoist the K/V projection into
    #   its own pallas_call so the query-tile axis can also be marked "parallel".
    return pl.pallas_call(
        kernel,
        out_shape=jax.ShapeDtypeStruct((N, S, D), x.dtype),
        grid_spec=pltpu.PrefetchScalarGridSpec(
            num_scalar_prefetch=0,
            grid=(N, n_q),
            in_specs=in_specs,
            out_specs=pl.BlockSpec((1, TQ, D), lambda b, qi: (b, qi, 0)),
            scratch_shapes=[pltpu.VMEM((2, S, D), bf16),    # cached K, V
                            pltpu.VMEM((TQ, D), bf16)],     # per-head outputs
        ),
        compiler_params=pltpu.CompilerParams(
            dimension_semantics=("parallel", "arbitrary"),
            vmem_limit_bytes=vmem_limit),
        cost_estimate=cost,
    )(x, x_kv,
      wq, bq, wkv, bkv, wo, bo,
      g1, beta1, w1, b1, w2, b2, g2, beta2)


def init_params(key, d_model, d_ff):
    keys = jax.random.split(key, 12)

    def lin(kw, kb, fan_in, fan_out):
        bound = 1.0 / math.sqrt(fan_in)
        w = jax.random.uniform(kw, (fan_in, fan_out), jnp.float32, -bound, bound)
        b = jax.random.uniform(kb, (1, fan_out), jnp.float32, -bound, bound)
        return w, b

    wq, bq = lin(keys[0], keys[1], d_model, d_model)
    wk, bk = lin(keys[2], keys[3], d_model, d_model)
    wv, bv = lin(keys[4], keys[5], d_model, d_model)
    wo, bo = lin(keys[6], keys[7], d_model, d_model)
    w1, b1 = lin(keys[8], keys[9], d_model, d_ff)
    w2, b2 = lin(keys[10], keys[11], d_ff, d_model)
    ones = jnp.ones((1, d_model), jnp.float32)
    zeros = jnp.zeros((1, d_model), jnp.float32)
    return dict(wq=wq, bq=bq, wk=wk, bk=bk, wv=wv, bv=bv, wo=wo, bo=bo,
                w1=w1, b1=b1, w2=w2, b2=b2,
                gamma1=ones, beta1=zeros, gamma2=ones, beta2=zeros)


def encoder_layer_ref(x, params, *, heads):
    """Pure-JAX reference mirroring the PyTorch module (eval mode, f32)."""
    N, S, D = x.shape
    d_k = D // heads
    eps = 1e-5

    def proj(a, w, b):
        return a @ w + b[0]

    q = proj(x, params["wq"], params["bq"]).reshape(N, S, heads, d_k).transpose(0, 2, 1, 3)
    k = proj(x, params["wk"], params["bk"]).reshape(N, S, heads, d_k).transpose(0, 2, 1, 3)
    v = proj(x, params["wv"], params["bv"]).reshape(N, S, heads, d_k).transpose(0, 2, 1, 3)
    scores = jnp.einsum("nhqd,nhkd->nhqk", q, k) / math.sqrt(d_k)
    p = jax.nn.softmax(scores, axis=-1)
    attn = jnp.einsum("nhqk,nhkd->nhqd", p, v).transpose(0, 2, 1, 3).reshape(N, S, D)
    attn = proj(attn, params["wo"], params["bo"])

    def ln(a, g, b):
        mu = a.mean(-1, keepdims=True)
        var = ((a - mu) ** 2).mean(-1, keepdims=True)
        return (a - mu) * jax.lax.rsqrt(var + eps) * g[0] + b[0]

    out1 = ln(x + attn, params["gamma1"], params["beta1"])
    h = jnp.maximum(proj(out1, params["w1"], params["b1"]), 0.0)
    h = proj(h, params["w2"], params["b2"])
    return ln(out1 + h, params["gamma2"], params["beta2"])


if __name__ == "__main__":
    N, S, D, H, F = 2, 8, 32, 4, 64
    key = jax.random.PRNGKey(0)
    kx, kp = jax.random.split(key)
    x = jax.random.normal(kx, (N, S, D), jnp.float32)
    params = init_params(kp, D, F)

    out = encoder_layer(x, params, heads=H)
    out = jax.block_until_ready(out)

    ref = encoder_layer_ref(x, params, heads=H)
    assert out.shape == (N, S, D)
    # bf16 matmul operands (f32 accumulation) + approx reciprocal softmax
    # denominator -> intentionally looser tolerance (eval-mode kernel).
    assert jnp.allclose(out, ref, atol=5e-2, rtol=5e-2), \
        f"max abs err {jnp.max(jnp.abs(out - ref))}"
    print("KERNEL_OK")
</pallas_src>

<mosaic_0001>
module attributes {stable_mosaic.version = 11 : i64} {
  func.func @_encoder_layer_kernel(%arg0: i32, %arg1: i32, %arg2: memref<1x8x32xf32, #tpu.memory_space<vmem>>, %arg3: memref<1x8x32xbf16, #tpu.memory_space<vmem>>, %arg4: memref<32x32xbf16, #tpu.memory_space<vmem>>, %arg5: memref<1x32xf32, #tpu.memory_space<vmem>>, %arg6: memref<32x64xbf16, #tpu.memory_space<vmem>>, %arg7: memref<1x64xf32, #tpu.memory_space<vmem>>, %arg8: memref<32x32xbf16, #tpu.memory_space<vmem>>, %arg9: memref<1x32xf32, #tpu.memory_space<vmem>>, %arg10: memref<1x32xf32, #tpu.memory_space<vmem>>, %arg11: memref<1x32xf32, #tpu.memory_space<vmem>>, %arg12: memref<32x64xbf16, #tpu.memory_space<vmem>>, %arg13: memref<1x64xf32, #tpu.memory_space<vmem>>, %arg14: memref<64x32xbf16, #tpu.memory_space<vmem>>, %arg15: memref<1x32xf32, #tpu.memory_space<vmem>>, %arg16: memref<1x32xf32, #tpu.memory_space<vmem>>, %arg17: memref<1x32xf32, #tpu.memory_space<vmem>>, %arg18: memref<1x8x32xf32, #tpu.memory_space<vmem>>, %arg19: memref<2x8x32xbf16, #tpu.memory_space<vmem>>, %arg20: memref<8x32xbf16, #tpu.memory_space<vmem>>) attributes {dimension_semantics = [#tpu.dimension_semantics<parallel>, #tpu.dimension_semantics<arbitrary>], iteration_bounds = array<i64: 2, 1>, scalar_prefetch = 0 : i64, scratch_operands = 2 : i64, tpu.core_type = #tpu.core_type<tc>, window_params = [{transform_indices = @transform_0, window_bounds = array<i64: 1, 8, 32>}, {transform_indices = @transform_1, window_bounds = array<i64: 1, 8, 32>}, {pipeline_mode = #tpu.pipeline_mode<synchronous>, transform_indices = @transform_2, window_bounds = array<i64: 32, 32>}, {pipeline_mode = #tpu.pipeline_mode<synchronous>, transform_indices = @transform_3, window_bounds = array<i64: 1, 32>}, {pipeline_mode = #tpu.pipeline_mode<synchronous>, transform_indices = @transform_4, window_bounds = array<i64: 32, 64>}, {pipeline_mode = #tpu.pipeline_mode<synchronous>, transform_indices = @transform_5, window_bounds = array<i64: 1, 64>}, {pipeline_mode = #tpu.pipeline_mode<synchronous>, transform_indices = @transform_6, window_bounds = array<i64: 32, 32>}, {pipeline_mode = #tpu.pipeline_mode<synchronous>, transform_indices = @transform_7, window_bounds = array<i64: 1, 32>}, {pipeline_mode = #tpu.pipeline_mode<synchronous>, transform_indices = @transform_8, window_bounds = array<i64: 1, 32>}, {pipeline_mode = #tpu.pipeline_mode<synchronous>, transform_indices = @transform_9, window_bounds = array<i64: 1, 32>}, {pipeline_mode = #tpu.pipeline_mode<synchronous>, transform_indices = @transform_10, window_bounds = array<i64: 32, 64>}, {pipeline_mode = #tpu.pipeline_mode<synchronous>, transform_indices = @transform_11, window_bounds = array<i64: 1, 64>}, {pipeline_mode = #tpu.pipeline_mode<synchronous>, transform_indices = @transform_12, window_bounds = array<i64: 64, 32>}, {pipeline_mode = #tpu.pipeline_mode<synchronous>, transform_indices = @transform_13, window_bounds = array<i64: 1, 32>}, {pipeline_mode = #tpu.pipeline_mode<synchronous>, transform_indices = @transform_14, window_bounds = array<i64: 1, 32>}, {pipeline_mode = #tpu.pipeline_mode<synchronous>, transform_indices = @transform_15, window_bounds = array<i64: 1, 32>}, {transform_indices = @transform_16, window_bounds = array<i64: 1, 8, 32>}]} {
    %c0_i32 = arith.constant 0 : i32
    %0 = arith.cmpi eq, %arg1, %c0_i32 : i32
    %1 = arith.extui %0 : i1 to i32
    %c0_i32_0 = arith.constant 0 : i32
    %2 = arith.cmpi ne, %1, %c0_i32_0 : i32
    scf.if %2 {
      %c0_74 = arith.constant 0 : index
      %c0_75 = arith.constant 0 : index
      %c0_76 = arith.constant 0 : index
      %168 = vector.load %arg3[%c0_74, %c0_75, %c0_76] : memref<1x8x32xbf16, #tpu.memory_space<vmem>>, vector<1x8x32xbf16>
      %169 = vector.shape_cast %168 : vector<1x8x32xbf16> to vector<8x32xbf16>
      %c0_77 = arith.constant 0 : index
      %c0_78 = arith.constant 0 : index
      %170 = vector.load %arg6[%c0_77, %c0_78] : memref<32x64xbf16, #tpu.memory_space<vmem>>, vector<32x64xbf16>
      %cst_79 = arith.constant dense<0.000000e+00> : vector<8x64xf32>
      %171 = tpu.matmul %169, %170, %cst_79 {dimension_numbers = #tpu.dot_dimension_numbers<[1], [0], [0], [1], [0, 0, 1, 1], [], []>} : vector<8x32xbf16>, vector<32x64xbf16>, vector<8x64xf32> -> vector<8x64xf32>
      %c0_80 = arith.constant 0 : index
      %c0_81 = arith.constant 0 : index
      %172 = vector.load %arg7[%c0_80, %c0_81] : memref<1x64xf32, #tpu.memory_space<vmem>>, vector<1x64xf32>
      %173 = vector.broadcast %172 : vector<1x64xf32> to vector<8x64xf32>
      %174 = arith.addf %171, %173 : vector<8x64xf32>
      %175 = vector.extract_strided_slice %174 {offsets = [0, 0], sizes = [8, 32], strides = [1, 1]} : vector<8x64xf32> to vector<8x32xf32>
      %176 = arith.truncf %175 : vector<8x32xf32> to vector<8x32xbf16>
      %c0_82 = arith.constant 0 : index
      %c0_83 = arith.constant 0 : index
      %c0_84 = arith.constant 0 : index
      %177 = vector.load %arg19[%c0_82, %c0_83, %c0_84] : memref<2x8x32xbf16, #tpu.memory_space<vmem>>, vector<1x8x32xbf16>
      %178 = vector.shape_cast %177 : vector<1x8x32xbf16> to vector<8x32xbf16>
      %179 = vector.shape_cast %176 : vector<8x32xbf16> to vector<1x8x32xbf16>
      tpu.vector_store %arg19[%c0_82, %c0_83, %c0_84], %179 {strides = array<i32>} : memref<2x8x32xbf16, #tpu.memory_space<vmem>>, vector<1x8x32xbf16>,
      %180 = vector.extract_strided_slice %174 {offsets = [0, 32], sizes = [8, 32], strides = [1, 1]} : vector<8x64xf32> to vector<8x32xf32>
      %181 = arith.truncf %180 : vector<8x32xf32> to vector<8x32xbf16>
      %c1_85 = arith.constant 1 : index
      %c0_86 = arith.constant 0 : index
      %c0_87 = arith.constant 0 : index
      %182 = vector.load %arg19[%c1_85, %c0_86, %c0_87] : memref<2x8x32xbf16, #tpu.memory_space<vmem>>, vector<1x8x32xbf16>
      %183 = vector.shape_cast %182 : vector<1x8x32xbf16> to vector<8x32xbf16>
      %184 = vector.shape_cast %181 : vector<8x32xbf16> to vector<1x8x32xbf16>
      tpu.vector_store %arg19[%c1_85, %c0_86, %c0_87], %184 {strides = array<i32>} : memref<2x8x32xbf16, #tpu.memory_space<vmem>>, vector<1x8x32xbf16>,
    } else {
    }
    %c0 = arith.constant 0 : index
    %c0_1 = arith.constant 0 : index
    %c0_2 = arith.constant 0 : index
    %3 = vector.load %arg2[%c0, %c0_1, %c0_2] : memref<1x8x32xf32, #tpu.memory_space<vmem>>, vector<1x8x32xf32>
    %4 = vector.shape_cast %3 : vector<1x8x32xf32> to vector<8x32xf32>
    %5 = arith.truncf %4 : vector<8x32xf32> to vector<8x32xbf16>
    %c0_3 = arith.constant 0 : index
    %c0_4 = arith.constant 0 : index
    %6 = vector.load %arg4[%c0_3, %c0_4] : memref<32x32xbf16, #tpu.memory_space<vmem>>, vector<32x32xbf16>
    %cst = arith.constant dense<0.000000e+00> : vector<8x32xf32>
    %7 = tpu.matmul %5, %6, %cst {dimension_numbers = #tpu.dot_dimension_numbers<[1], [0], [0], [1], [0, 0, 1, 1], [], []>} : vector<8x32xbf16>, vector<32x32xbf16>, vector<8x32xf32> -> vector<8x32xf32>
    %c0_5 = arith.constant 0 : index
    %c0_6 = arith.constant 0 : index
    %8 = vector.load %arg5[%c0_5, %c0_6] : memref<1x32xf32, #tpu.memory_space<vmem>>, vector<1x32xf32>
    %9 = vector.broadcast %8 : vector<1x32xf32> to vector<8x32xf32>
    %10 = arith.addf %7, %9 : vector<8x32xf32>
    %c0_7 = arith.constant 0 : index
    %c0_8 = arith.constant 0 : index
    %c0_9 = arith.constant 0 : index
    %11 = vector.load %arg19[%c0_7, %c0_8, %c0_9] : memref<2x8x32xbf16, #tpu.memory_space<vmem>>, vector<1x8x32xbf16>
    %12 = vector.shape_cast %11 : vector<1x8x32xbf16> to vector<8x32xbf16>
    %c1 = arith.constant 1 : index
    %c0_10 = arith.constant 0 : index
    %c0_11 = arith.constant 0 : index
    %13 = vector.load %arg19[%c1, %c0_10, %c0_11] : memref<2x8x32xbf16, #tpu.memory_space<vmem>>, vector<1x8x32xbf16>
    %14 = vector.shape_cast %13 : vector<1x8x32xbf16> to vector<8x32xbf16>
    %15 = vector.extract_strided_slice %10 {offsets = [0, 0], sizes = [8, 8], strides = [1, 1]} : vector<8x32xf32> to vector<8x8xf32>
    %16 = arith.truncf %15 : vector<8x8xf32> to vector<8x8xbf16>
    %17 = vector.extract_strided_slice %12 {offsets = [0, 0], sizes = [8, 8], strides = [1, 1]} : vector<8x32xbf16> to vector<8x8xbf16>
    %18 = vector.extract_strided_slice %14 {offsets = [0, 0], sizes = [8, 8], strides = [1, 1]} : vector<8x32xbf16> to vector<8x8xbf16>
    %cst_12 = arith.constant dense<0.000000e+00> : vector<8x8xf32>
    %19 = tpu.matmul %16, %17, %cst_12 {dimension_numbers = #tpu.dot_dimension_numbers<[1], [1], [0], [0], [0, 0, 1, 0], [], []>} : vector<8x8xbf16>, vector<8x8xbf16>, vector<8x8xf32> -> vector<8x8xf32>
    %cst_13 = arith.constant dense<0xFF800000> : vector<8xf32>
    %20 = vector.multi_reduction <maximumf>, %19, %cst_13 [1] : vector<8x8xf32> to vector<8xf32>
    %21 = vector.shape_cast %20 : vector<8xf32> to vector<8x1xf32>
    %22 = vector.broadcast %21 : vector<8x1xf32> to vector<8x8xf32>
    %23 = arith.subf %19, %22 : vector<8x8xf32>
    %24 = math.exp %23 : vector<8x8xf32>
    %cst_14 = arith.constant dense<0.000000e+00> : vector<8xf32>
    %25 = vector.multi_reduction <add>, %24, %cst_14 [1] : vector<8x8xf32> to vector<8xf32>
    %26 = vector.shape_cast %25 : vector<8xf32> to vector<8x1xf32>
    %27 = arith.truncf %24 : vector<8x8xf32> to vector<8x8xbf16>
    %cst_15 = arith.constant dense<0.000000e+00> : vector<8x8xf32>
    %28 = tpu.matmul %27, %18, %cst_15 {dimension_numbers = #tpu.dot_dimension_numbers<[1], [0], [0], [1], [0, 0, 1, 1], [], []>} : vector<8x8xbf16>, vector<8x8xbf16>, vector<8x8xf32> -> vector<8x8xf32>
    %29 = tpu.reciprocal %26 {approx = true} : vector<8x1xf32> -> vector<8x1xf32>
    %30 = vector.broadcast %29 : vector<8x1xf32> to vector<8x8xf32>
    %31 = arith.mulf %28, %30 : vector<8x8xf32>
    %32 = arith.truncf %31 : vector<8x8xf32> to vector<8x8xbf16>
    %c0_16 = arith.constant 0 : index
    %c0_17 = arith.constant 0 : index
    %33 = vector.load %arg20[%c0_16, %c0_17] : memref<8x32xbf16, #tpu.memory_space<vmem>>, vector<8x8xbf16>
    tpu.vector_store %arg20[%c0_16, %c0_17], %32 {strides = array<i32>} : memref<8x32xbf16, #tpu.memory_space<vmem>>, vector<8x8xbf16>,
    %34 = vector.extract_strided_slice %10 {offsets = [0, 8], sizes = [8, 8], strides = [1, 1]} : vector<8x32xf32> to vector<8x8xf32>
    %35 = arith.truncf %34 : vector<8x8xf32> to vector<8x8xbf16>
    %36 = vector.extract_strided_slice %12 {offsets = [0, 8], sizes = [8, 8], strides = [1, 1]} : vector<8x32xbf16> to vector<8x8xbf16>
    %37 = vector.extract_strided_slice %14 {offsets = [0, 8], sizes = [8, 8], strides = [1, 1]} : vector<8x32xbf16> to vector<8x8xbf16>
    %cst_18 = arith.constant dense<0.000000e+00> : vector<8x8xf32>
    %38 = tpu.matmul %35, %36, %cst_18 {dimension_numbers = #tpu.dot_dimension_numbers<[1], [1], [0], [0], [0, 0, 1, 0], [], []>} : vector<8x8xbf16>, vector<8x8xbf16>, vector<8x8xf32> -> vector<8x8xf32>
    %cst_19 = arith.constant dense<0xFF800000> : vector<8xf32>
    %39 = vector.multi_reduction <maximumf>, %38, %cst_19 [1] : vector<8x8xf32> to vector<8xf32>
    %40 = vector.shape_cast %39 : vector<8xf32> to vector<8x1xf32>
    %41 = vector.broadcast %40 : vector<8x1xf32> to vector<8x8xf32>
    %42 = arith.subf %38, %41 : vector<8x8xf32>
    %43 = math.exp %42 : vector<8x8xf32>
    %cst_20 = arith.constant dense<0.000000e+00> : vector<8xf32>
    %44 = vector.multi_reduction <add>, %43, %cst_20 [1] : vector<8x8xf32> to vector<8xf32>
    %45 = vector.shape_cast %44 : vector<8xf32> to vector<8x1xf32>
    %46 = arith.truncf %43 : vector<8x8xf32> to vector<8x8xbf16>
    %cst_21 = arith.constant dense<0.000000e+00> : vector<8x8xf32>
    %47 = tpu.matmul %46, %37, %cst_21 {dimension_numbers = #tpu.dot_dimension_numbers<[1], [0], [0], [1], [0, 0, 1, 1], [], []>} : vector<8x8xbf16>, vector<8x8xbf16>, vector<8x8xf32> -> vector<8x8xf32>
    %48 = tpu.reciprocal %45 {approx = true} : vector<8x1xf32> -> vector<8x1xf32>
    %49 = vector.broadcast %48 : vector<8x1xf32> to vector<8x8xf32>
    %50 = arith.mulf %47, %49 : vector<8x8xf32>
    %51 = arith.truncf %50 : vector<8x8xf32> to vector<8x8xbf16>
    %c0_22 = arith.constant 0 : index
    %c8 = arith.constant 8 : index
    %52 = vector.load %arg20[%c0_22, %c8] : memref<8x32xbf16, #tpu.memory_space<vmem>>, vector<8x8xbf16>
    tpu.vector_store %arg20[%c0_22, %c8], %51 {strides = array<i32>} : memref<8x32xbf16, #tpu.memory_space<vmem>>, vector<8x8xbf16>,
    %53 = vector.extract_strided_slice %10 {offsets = [0, 16], sizes = [8, 8], strides = [1, 1]} : vector<8x32xf32> to vector<8x8xf32>
    %54 = arith.truncf %53 : vector<8x8xf32> to vector<8x8xbf16>
    %55 = vector.extract_strided_slice %12 {offsets = [0, 16], sizes = [8, 8], strides = [1, 1]} : vector<8x32xbf16> to vector<8x8xbf16>
    %56 = vector.extract_strided_slice %14 {offsets = [0, 16], sizes = [8, 8], strides = [1, 1]} : vector<8x32xbf16> to vector<8x8xbf16>
    %cst_23 = arith.constant dense<0.000000e+00> : vector<8x8xf32>
    %57 = tpu.matmul %54, %55, %cst_23 {dimension_numbers = #tpu.dot_dimension_numbers<[1], [1], [0], [0], [0, 0, 1, 0], [], []>} : vector<8x8xbf16>, vector<8x8xbf16>, vector<8x8xf32> -> vector<8x8xf32>
    %cst_24 = arith.constant dense<0xFF800000> : vector<8xf32>
    %58 = vector.multi_reduction <maximumf>, %57, %cst_24 [1] : vector<8x8xf32> to vector<8xf32>
    %59 = vector.shape_cast %58 : vector<8xf32> to vector<8x1xf32>
    %60 = vector.broadcast %59 : vector<8x1xf32> to vector<8x8xf32>
    %61 = arith.subf %57, %60 : vector<8x8xf32>
    %62 = math.exp %61 : vector<8x8xf32>
    %cst_25 = arith.constant dense<0.000000e+00> : vector<8xf32>
    %63 = vector.multi_reduction <add>, %62, %cst_25 [1] : vector<8x8xf32> to vector<8xf32>
    %64 = vector.shape_cast %63 : vector<8xf32> to vector<8x1xf32>
    %65 = arith.truncf %62 : vector<8x8xf32> to vector<8x8xbf16>
    %cst_26 = arith.constant dense<0.000000e+00> : vector<8x8xf32>
    %66 = tpu.matmul %65, %56, %cst_26 {dimension_numbers = #tpu.dot_dimension_numbers<[1], [0], [0], [1], [0, 0, 1, 1], [], []>} : vector<8x8xbf16>, vector<8x8xbf16>, vector<8x8xf32> -> vector<8x8xf32>
    %67 = tpu.reciprocal %64 {approx = true} : vector<8x1xf32> -> vector<8x1xf32>
    %68 = vector.broadcast %67 : vector<8x1xf32> to vector<8x8xf32>
    %69 = arith.mulf %66, %68 : vector<8x8xf32>
    %70 = arith.truncf %69 : vector<8x8xf32> to vector<8x8xbf16>
    %c0_27 = arith.constant 0 : index
    %c16 = arith.constant 16 : index
    %71 = vector.load %arg20[%c0_27, %c16] : memref<8x32xbf16, #tpu.memory_space<vmem>>, vector<8x8xbf16>
    tpu.vector_store %arg20[%c0_27, %c16], %70 {strides = array<i32>} : memref<8x32xbf16, #tpu.memory_space<vmem>>, vector<8x8xbf16>,
    %72 = vector.extract_strided_slice %10 {offsets = [0, 24], sizes = [8, 8], strides = [1, 1]} : vector<8x32xf32> to vector<8x8xf32>
    %73 = arith.truncf %72 : vector<8x8xf32> to vector<8x8xbf16>
    %74 = vector.extract_strided_slice %12 {offsets = [0, 24], sizes = [8, 8], strides = [1, 1]} : vector<8x32xbf16> to vector<8x8xbf16>
    %75 = vector.extract_strided_slice %14 {offsets = [0, 24], sizes = [8, 8], strides = [1, 1]} : vector<8x32xbf16> to vector<8x8xbf16>
    %cst_28 = arith.constant dense<0.000000e+00> : vector<8x8xf32>
    %76 = tpu.matmul %73, %74, %cst_28 {dimension_numbers = #tpu.dot_dimension_numbers<[1], [1], [0], [0], [0, 0, 1, 0], [], []>} : vector<8x8xbf16>, vector<8x8xbf16>, vector<8x8xf32> -> vector<8x8xf32>
    %cst_29 = arith.constant dense<0xFF800000> : vector<8xf32>
    %77 = vector.multi_reduction <maximumf>, %76, %cst_29 [1] : vector<8x8xf32> to vector<8xf32>
    %78 = vector.shape_cast %77 : vector<8xf32> to vector<8x1xf32>
    %79 = vector.broadcast %78 : vector<8x1xf32> to vector<8x8xf32>
    %80 = arith.subf %76, %79 : vector<8x8xf32>
    %81 = math.exp %80 : vector<8x8xf32>
    %cst_30 = arith.constant dense<0.000000e+00> : vector<8xf32>
    %82 = vector.multi_reduction <add>, %81, %cst_30 [1] : vector<8x8xf32> to vector<8xf32>
    %83 = vector.shape_cast %82 : vector<8xf32> to vector<8x1xf32>
    %84 = arith.truncf %81 : vector<8x8xf32> to vector<8x8xbf16>
    %cst_31 = arith.constant dense<0.000000e+00> : vector<8x8xf32>
    %85 = tpu.matmul %84, %75, %cst_31 {dimension_numbers = #tpu.dot_dimension_numbers<[1], [0], [0], [1], [0, 0, 1, 1], [], []>} : vector<8x8xbf16>, vector<8x8xbf16>, vector<8x8xf32> -> vector<8x8xf32>
    %86 = tpu.reciprocal %83 {approx = true} : vector<8x1xf32> -> vector<8x1xf32>
    %87 = vector.broadcast %86 : vector<8x1xf32> to vector<8x8xf32>
    %88 = arith.mulf %85, %87 : vector<8x8xf32>
    %89 = arith.truncf %88 : vector<8x8xf32> to vector<8x8xbf16>
    %c0_32 = arith.constant 0 : index
    %c24 = arith.constant 24 : index
    %90 = vector.load %arg20[%c0_32, %c24] : memref<8x32xbf16, #tpu.memory_space<vmem>>, vector<8x8xbf16>
    tpu.vector_store %arg20[%c0_32, %c24], %89 {strides = array<i32>} : memref<8x32xbf16, #tpu.memory_space<vmem>>, vector<8x8xbf16>,
    %c0_33 = arith.constant 0 : index
    %c0_34 = arith.constant 0 : index
    %91 = vector.load %arg20[%c0_33, %c0_34] : memref<8x32xbf16, #tpu.memory_space<vmem>>, vector<8x32xbf16>
    %c0_35 = arith.constant 0 : index
    %c0_36 = arith.constant 0 : index
    %92 = vector.load %arg8[%c0_35, %c0_36] : memref<32x32xbf16, #tpu.memory_space<vmem>>, vector<32x32xbf16>
    %cst_37 = arith.constant dense<0.000000e+00> : vector<8x32xf32>
    %93 = tpu.matmul %91, %92, %cst_37 {dimension_numbers = #tpu.dot_dimension_numbers<[1], [0], [0], [1], [0, 0, 1, 1], [], []>} : vector<8x32xbf16>, vector<32x32xbf16>, vector<8x32xf32> -> vector<8x32xf32>
    %c0_38 = arith.constant 0 : index
    %c0_39 = arith.constant 0 : index
    %94 = vector.load %arg9[%c0_38, %c0_39] : memref<1x32xf32, #tpu.memory_space<vmem>>, vector<1x32xf32>
    %95 = vector.broadcast %94 : vector<1x32xf32> to vector<8x32xf32>
    %96 = arith.addf %93, %95 : vector<8x32xf32>
    %97 = arith.addf %4, %96 : vector<8x32xf32>
    %cst_40 = arith.constant dense<0.000000e+00> : vector<8xf32>
    %98 = vector.multi_reduction <add>, %97, %cst_40 [1] : vector<8x32xf32> to vector<8xf32>
    %99 = vector.shape_cast %98 : vector<8xf32> to vector<8x1xf32>
    %cst_41 = arith.constant 3.200000e+01 : f32
    %100 = vector.broadcast %cst_41 : f32 to vector<8x1xf32>
    %101 = arith.divf %99, %100 : vector<8x1xf32>
    %102 = arith.mulf %97, %97 : vector<8x32xf32>
    %cst_42 = arith.constant dense<0.000000e+00> : vector<8xf32>
    %103 = vector.multi_reduction <add>, %102, %cst_42 [1] : vector<8x32xf32> to vector<8xf32>
    %104 = vector.shape_cast %103 : vector<8xf32> to vector<8x1xf32>
    %cst_43 = arith.constant 3.200000e+01 : f32
    %105 = vector.broadcast %cst_43 : f32 to vector<8x1xf32>
    %106 = arith.divf %104, %105 : vector<8x1xf32>
    %107 = arith.mulf %101, %101 : vector<8x1xf32>
    %108 = arith.subf %106, %107 : vector<8x1xf32>
    %cst_44 = arith.constant 0.000000e+00 : f32
    %109 = vector.broadcast %cst_44 : f32 to vector<8x1xf32>
    %110 = arith.maximumf %108, %109 : vector<8x1xf32>
    %111 = vector.broadcast %101 : vector<8x1xf32> to vector<8x32xf32>
    %112 = arith.subf %97, %111 : vector<8x32xf32>
    %cst_45 = arith.constant 9.99999974E-6 : f32
    %113 = vector.broadcast %cst_45 : f32 to vector<8x1xf32>
    %114 = arith.addf %110, %113 : vector<8x1xf32>
    %115 = math.rsqrt %114 : vector<8x1xf32>
    %116 = vector.broadcast %115 : vector<8x1xf32> to vector<8x32xf32>
    %117 = arith.mulf %112, %116 : vector<8x32xf32>
    %c0_46 = arith.constant 0 : index
    %c0_47 = arith.constant 0 : index
    %118 = vector.load %arg10[%c0_46, %c0_47] : memref<1x32xf32, #tpu.memory_space<vmem>>, vector<1x32xf32>
    %119 = vector.broadcast %118 : vector<1x32xf32> to vector<8x32xf32>
    %120 = arith.mulf %117, %119 : vector<8x32xf32>
    %c0_48 = arith.constant 0 : index
    %c0_49 = arith.constant 0 : index
    %121 = vector.load %arg11[%c0_48, %c0_49] : memref<1x32xf32, #tpu.memory_space<vmem>>, vector<1x32xf32>
    %122 = vector.broadcast %121 : vector<1x32xf32> to vector<8x32xf32>
    %123 = arith.addf %120, %122 : vector<8x32xf32>
    %124 = arith.truncf %123 : vector<8x32xf32> to vector<8x32xbf16>
    %c0_50 = arith.constant 0 : index
    %c0_51 = arith.constant 0 : index
    %125 = vector.load %arg12[%c0_50, %c0_51] : memref<32x64xbf16, #tpu.memory_space<vmem>>, vector<32x64xbf16>
    %cst_52 = arith.constant dense<0.000000e+00> : vector<8x64xf32>
    %126 = tpu.matmul %124, %125, %cst_52 {dimension_numbers = #tpu.dot_dimension_numbers<[1], [0], [0], [1], [0, 0, 1, 1], [], []>} : vector<8x32xbf16>, vector<32x64xbf16>, vector<8x64xf32> -> vector<8x64xf32>
    %c0_53 = arith.constant 0 : index
    %c0_54 = arith.constant 0 : index
    %127 = vector.load %arg13[%c0_53, %c0_54] : memref<1x64xf32, #tpu.memory_space<vmem>>, vector<1x64xf32>
    %128 = vector.broadcast %127 : vector<1x64xf32> to vector<8x64xf32>
    %129 = arith.addf %126, %128 : vector<8x64xf32>
    %cst_55 = arith.constant 0.000000e+00 : f32
    %130 = vector.broadcast %cst_55 : f32 to vector<8x64xf32>
    %131 = arith.maximumf %129, %130 : vector<8x64xf32>
    %132 = arith.truncf %131 : vector<8x64xf32> to vector<8x64xbf16>
    %c0_56 = arith.constant 0 : index
    %c0_57 = arith.constant 0 : index
    %133 = vector.load %arg14[%c0_56, %c0_57] : memref<64x32xbf16, #tpu.memory_space<vmem>>, vector<64x32xbf16>
    %cst_58 = arith.constant dense<0.000000e+00> : vector<8x32xf32>
    %134 = tpu.matmul %132, %133, %cst_58 {dimension_numbers = #tpu.dot_dimension_numbers<[1], [0], [0], [1], [0, 0, 1, 1], [], []>} : vector<8x64xbf16>, vector<64x32xbf16>, vector<8x32xf32> -> vector<8x32xf32>
    %c0_59 = arith.constant 0 : index
    %c0_60 = arith.constant 0 : index
    %135 = vector.load %arg15[%c0_59, %c0_60] : memref<1x32xf32, #tpu.memory_space<vmem>>, vector<1x32xf32>
    %136 = vector.broadcast %135 : vector<1x32xf32> to vector<8x32xf32>
    %137 = arith.addf %134, %136 : vector<8x32xf32>
    %138 = arith.addf %123, %137 : vector<8x32xf32>
    %cst_61 = arith.constant dense<0.000000e+00> : vector<8xf32>
    %139 = vector.multi_reduction <add>, %138, %cst_61 [1] : vector<8x32xf32> to vector<8xf32>
    %140 = vector.shape_cast %139 : vector<8xf32> to vector<8x1xf32>
    %cst_62 = arith.constant 3.200000e+01 : f32
    %141 = vector.broadcast %cst_62 : f32 to vector<8x1xf32>
    %142 = arith.divf %140, %141 : vector<8x1xf32>
    %143 = arith.mulf %138, %138 : vector<8x32xf32>
    %cst_63 = arith.constant dense<0.000000e+00> : vector<8xf32>
    %144 = vector.multi_reduction <add>, %143, %cst_63 [1] : vector<8x32xf32> to vector<8xf32>
    %145 = vector.shape_cast %144 : vector<8xf32> to vector<8x1xf32>
    %cst_64 = arith.constant 3.200000e+01 : f32
    %146 = vector.broadcast %cst_64 : f32 to vector<8x1xf32>
    %147 = arith.divf %145, %146 : vector<8x1xf32>
    %148 = arith.mulf %142, %142 : vector<8x1xf32>
    %149 = arith.subf %147, %148 : vector<8x1xf32>
    %cst_65 = arith.constant 0.000000e+00 : f32
    %150 = vector.broadcast %cst_65 : f32 to vector<8x1xf32>
    %151 = arith.maximumf %149, %150 : vector<8x1xf32>
    %152 = vector.broadcast %142 : vector<8x1xf32> to vector<8x32xf32>
    %153 = arith.subf %138, %152 : vector<8x32xf32>
    %cst_66 = arith.constant 9.99999974E-6 : f32
    %154 = vector.broadcast %cst_66 : f32 to vector<8x1xf32>
    %155 = arith.addf %151, %154 : vector<8x1xf32>
    %156 = math.rsqrt %155 : vector<8x1xf32>
    %157 = vector.broadcast %156 : vector<8x1xf32> to vector<8x32xf32>
    %158 = arith.mulf %153, %157 : vector<8x32xf32>
    %c0_67 = arith.constant 0 : index
    %c0_68 = arith.constant 0 : index
    %159 = vector.load %arg16[%c0_67, %c0_68] : memref<1x32xf32, #tpu.memory_space<vmem>>, vector<1x32xf32>
    %160 = vector.broadcast %159 : vector<1x32xf32> to vector<8x32xf32>
    %161 = arith.mulf %158, %160 : vector<8x32xf32>
    %c0_69 = arith.constant 0 : index
    %c0_70 = arith.constant 0 : index
    %162 = vector.load %arg17[%c0_69, %c0_70] : memref<1x32xf32, #tpu.memory_space<vmem>>, vector<1x32xf32>
    %163 = vector.broadcast %162 : vector<1x32xf32> to vector<8x32xf32>
    %164 = arith.addf %161, %163 : vector<8x32xf32>
    %c0_71 = arith.constant 0 : index
    %c0_72 = arith.constant 0 : index
    %c0_73 = arith.constant 0 : index
    %165 = vector.load %arg18[%c0_71, %c0_72, %c0_73] : memref<1x8x32xf32, #tpu.memory_space<vmem>>, vector<1x8x32xf32>
    %166 = vector.shape_cast %165 : vector<1x8x32xf32> to vector<8x32xf32>
    %167 = vector.shape_cast %164 : vector<8x32xf32> to vector<1x8x32xf32>
    tpu.vector_store %arg18[%c0_71, %c0_72, %c0_73], %167 {strides = array<i32>} : memref<1x8x32xf32, #tpu.memory_space<vmem>>, vector<1x8x32xf32>,
    return
  }
  func.func @transform_0(%arg0: i32, %arg1: i32) -> (i32, i32, i32) {
    %c0_i32 = arith.constant 0 : i32
    %c0_i32_0 = arith.constant 0 : i32
    return %arg0, %arg1, %c0_i32 : i32, i32, i32
  }
  func.func @transform_1(%arg0: i32, %arg1: i32) -> (i32, i32, i32) {
    %c0_i32 = arith.constant 0 : i32
    %c0_i32_0 = arith.constant 0 : i32
    %c0_i32_1 = arith.constant 0 : i32
    return %arg0, %c0_i32, %c0_i32_0 : i32, i32, i32
  }
  func.func @transform_2(%arg0: i32, %arg1: i32) -> (i32, i32) {
    %c0_i32 = arith.constant 0 : i32
    %c0_i32_0 = arith.constant 0 : i32
    %c0_i32_1 = arith.constant 0 : i32
    return %c0_i32, %c0_i32_0 : i32, i32
  }
  func.func @transform_3(%arg0: i32, %arg1: i32) -> (i32, i32) {
    %c0_i32 = arith.constant 0 : i32
    %c0_i32_0 = arith.constant 0 : i32
    %c0_i32_1 = arith.constant 0 : i32
    return %c0_i32, %c0_i32_0 : i32, i32
  }
  func.func @transform_4(%arg0: i32, %arg1: i32) -> (i32, i32) {
    %c0_i32 = arith.constant 0 : i32
    %c0_i32_0 = arith.constant 0 : i32
    %c0_i32_1 = arith.constant 0 : i32
    return %c0_i32, %c0_i32_0 : i32, i32
  }
  func.func @transform_5(%arg0: i32, %arg1: i32) -> (i32, i32) {
    %c0_i32 = arith.constant 0 : i32
    %c0_i32_0 = arith.constant 0 : i32
    %c0_i32_1 = arith.constant 0 : i32
    return %c0_i32, %c0_i32_0 : i32, i32
  }
  func.func @transform_6(%arg0: i32, %arg1: i32) -> (i32, i32) {
    %c0_i32 = arith.constant 0 : i32
    %c0_i32_0 = arith.constant 0 : i32
    %c0_i32_1 = arith.constant 0 : i32
    return %c0_i32, %c0_i32_0 : i32, i32
  }
  func.func @transform_7(%arg0: i32, %arg1: i32) -> (i32, i32) {
    %c0_i32 = arith.constant 0 : i32
    %c0_i32_0 = arith.constant 0 : i32
    %c0_i32_1 = arith.constant 0 : i32
    return %c0_i32, %c0_i32_0 : i32, i32
  }
  func.func @transform_8(%arg0: i32, %arg1: i32) -> (i32, i32) {
    %c0_i32 = arith.constant 0 : i32
    %c0_i32_0 = arith.constant 0 : i32
    %c0_i32_1 = arith.constant 0 : i32
    return %c0_i32, %c0_i32_0 : i32, i32
  }
  func.func @transform_9(%arg0: i32, %arg1: i32) -> (i32, i32) {
    %c0_i32 = arith.constant 0 : i32
    %c0_i32_0 = arith.constant 0 : i32
    %c0_i32_1 = arith.constant 0 : i32
    return %c0_i32, %c0_i32_0 : i32, i32
  }
  func.func @transform_10(%arg0: i32, %arg1: i32) -> (i32, i32) {
    %c0_i32 = arith.constant 0 : i32
    %c0_i32_0 = arith.constant 0 : i32
    %c0_i32_1 = arith.constant 0 : i32
    return %c0_i32, %c0_i32_0 : i32, i32
  }
  func.func @transform_11(%arg0: i32, %arg1: i32) -> (i32, i32) {
    %c0_i32 = arith.constant 0 : i32
    %c0_i32_0 = arith.constant 0 : i32
    %c0_i32_1 = arith.constant 0 : i32
    return %c0_i32, %c0_i32_0 : i32, i32
  }
  func.func @transform_12(%arg0: i32, %arg1: i32) -> (i32, i32) {
    %c0_i32 = arith.constant 0 : i32
    %c0_i32_0 = arith.constant 0 : i32
    %c0_i32_1 = arith.constant 0 : i32
    return %c0_i32, %c0_i32_0 : i32, i32
  }
  func.func @transform_13(%arg0: i32, %arg1: i32) -> (i32, i32) {
    %c0_i32 = arith.constant 0 : i32
    %c0_i32_0 = arith.constant 0 : i32
    %c0_i32_1 = arith.constant 0 : i32
    return %c0_i32, %c0_i32_0 : i32, i32
  }
  func.func @transform_14(%arg0: i32, %arg1: i32) -> (i32, i32) {
    %c0_i32 = arith.constant 0 : i32
    %c0_i32_0 = arith.constant 0 : i32
    %c0_i32_1 = arith.constant 0 : i32
    return %c0_i32, %c0_i32_0 : i32, i32
  }
  func.func @transform_15(%arg0: i32, %arg1: i32) -> (i32, i32) {
    %c0_i32 = arith.constant 0 : i32
    %c0_i32_0 = arith.constant 0 : i32
    %c0_i32_1 = arith.constant 0 : i32
    return %c0_i32, %c0_i32_0 : i32, i32
  }
  func.func @transform_16(%arg0: i32, %arg1: i32) -> (i32, i32, i32) {
    %c0_i32 = arith.constant 0 : i32
    %c0_i32_0 = arith.constant 0 : i32
    return %arg0, %arg1, %c0_i32 : i32, i32, i32
  }
}

</mosaic_0001>

<llo_original>
// kernel: tpu_custom_call.1
$region0: #{tpu_custom_call.1}
  #allocation0 [shape = 'u32[]', space=smem, size = 0x4, offset = 0x4, fixed_abs, tag = 'smem constant byte address 0x4 - core index']
  #allocation1 [shape = 'u32[144,128]{1,0:T(1,128)}', space=vmem, size = 0x12000, scoped, tag = 'internal scratch']
  #allocation2 [shape = 'bf16[2,8,32]{2,1,0:T(8,128)(2,1)}', space=vmem, size = 0x1000, scoped, tag = 'scratch operand']
  #allocation3 [shape = 'bf16[8,32]{1,0:T(8,128)(2,1)}', space=vmem, size = 0x800, scoped, tag = 'scratch operand']
  %s0 = inlined_call_operand.vmem [shape: f32[2,8,32], index: 0, kind: input, shape index: {}]
  %s1 = inlined_call_operand.hbm [shape: bf16[2,8,32], index: 1, kind: input, shape index: {}]
  %s2 = inlined_call_operand.vmem [shape: bf16[32,32], index: 2, kind: input, shape index: {}]
  %s3 = inlined_call_operand.vmem [shape: f32[1,32], index: 3, kind: input, shape index: {}]
  %s4 = inlined_call_operand.vmem [shape: bf16[32,64], index: 4, kind: input, shape index: {}]
  %s5 = inlined_call_operand.vmem [shape: f32[1,64], index: 5, kind: input, shape index: {}]
  %s6 = inlined_call_operand.hbm [shape: bf16[32,32], index: 6, kind: input, shape index: {}]
  %s7 = inlined_call_operand.hbm [shape: f32[1,32], index: 7, kind: input, shape index: {}]
  %s8 = inlined_call_operand.hbm [shape: f32[1,32], index: 8, kind: input, shape index: {}]
  %s9 = inlined_call_operand.hbm [shape: f32[1,32], index: 9, kind: input, shape index: {}]
  %s10 = inlined_call_operand.vmem [shape: bf16[32,64], index: 10, kind: input, shape index: {}]
  %s11 = inlined_call_operand.vmem [shape: f32[1,64], index: 11, kind: input, shape index: {}]
  %s12 = inlined_call_operand.vmem [shape: bf16[64,32], index: 12, kind: input, shape index: {}]
  %s13 = inlined_call_operand.vmem [shape: f32[1,32], index: 13, kind: input, shape index: {}]
  %s14 = inlined_call_operand.vmem [shape: f32[1,32], index: 14, kind: input, shape index: {}]
  %s15 = inlined_call_operand.vmem [shape: f32[1,32], index: 15, kind: input, shape index: {}]
  %s16 = inlined_call_operand.hbm [shape: f32[2,8,32], index: 16, kind: output, shape index: {}]
  %s17 = sld [smem:[#allocation0]]
  $region121: #{tpu_custom_call.1} parent=0
    _
  %s19 = ssub.s32 1, %s17
  %s20 = scalar_select 0, %s19, %s17
  $region1: #{tpu_custom_call.1} parent=0
    #allocation4 [shape = 'u8[4096]{0}', space=vmem, size = 0x1000, scoped, tag = 'input window, operand 1']
    #allocation5 [shape = 's32[2]{0}', space=sflag, size = 0x8, scoped, tag = 'scoped memory for tpu_custom_call.1']
    #allocation6 [shape = 's32[2]{0}', space=sflag, size = 0x8, scoped, tag = 'scoped memory for tpu_custom_call.1']
    #allocation7 [shape = 'u8[8192]{0}', space=vmem, size = 0x2000, scoped, tag = 'input window, operand 6, single buffered']
    #allocation8 [shape = 's32[1]{0}', space=sflag, size = 0x4, scoped, tag = 'scoped memory for tpu_custom_call.1']
    #allocation9 [shape = 'u8[512]{0}', space=vmem, size = 0x400, scoped, tag = 'input window, operand 7, single buffered']
    #allocation10 [shape = 'u8[512]{0}', space=vmem, size = 0x400, scoped, tag = 'input window, operand 8, single buffered']
    #allocation11 [shape = 's32[1]{0}', space=sflag, size = 0x4, scoped, tag = 'scoped memory for tpu_custom_call.1']
    #allocation12 [shape = 'u8[512]{0}', space=vmem, size = 0x400, scoped, tag = 'input window, operand 9, single buffered']
    #allocation13 [shape = 'u8[8192]{0}', space=vmem, size = 0x2000, scoped, tag = 'output window, operand 0']
    %21 = vsyncpa [#allocation5], 0
    %s22 = scalar_lea.sflag [#allocation5], 1
    %23 = vsyncpa %s22, 0
    %24 = vsyncpa [#allocation8], 0
    %25 = vsyncpa [#allocation11], 0
    %26 = vsyncpa [#allocation6], 0
    %s27 = scalar_lea.sflag [#allocation6], 1
    %28 = vsyncpa %s27, 0
    loop: start=0, step=1, limit=4
    $region2: #{tpu_custom_call.1} parent=1 // loop_pre_header
      _
    $region3: #{tpu_custom_call.1} parent=1 // loop_header
      %s30 = sphi 0, %s34
      %p31 = scmp.ge.s32.totalorder %s30, 4
      %s37 = sphi 0, %s49
      %s38 = sphi 0, %s45
      %s39 = sphi 0, %s37
      %s40 = sphi 0, %s38
      %s41 = sphi 0, %s39
      %s42 = sphi 0, %s40
      %s54 = sphi 0, %s56
      %s57 = sphi 0, %s54
      %s58 = sphi 0, %s57
      %s74 = sphi 0, %s58
      %s80 = sphi 0, %s82
      %s83 = sphi 0, %s80
      %s84 = sphi 0, %s83
      %s100 = sphi 0, %s84
      %s104 = sphi 0, %s104
      %s106 = sphi 0, %s104
      %s107 = sphi 0, %s106
      %s121 = sphi 0, %s107
      %s125 = sphi 0, %s125
      %s127 = sphi 0, %s125
      %s128 = sphi 0, %s127
      %s142 = sphi 0, %s128
      %s146 = sphi 0, %s146
      %s148 = sphi 0, %s146
      %s149 = sphi 0, %s148
      %s163 = sphi 0, %s149
      %s167 = sphi 0, %s167
      %s169 = sphi 0, %s167
      %s170 = sphi 0, %s169
      %s184 = sphi 0, %s170
      %s188 = sphi 0, %s188
      %s190 = sphi 0, %s188
      %s191 = sphi 0, %s190
      %s205 = sphi 0, %s191
      %s209 = sphi 0, %s209
      %s211 = sphi 0, %s209
      %s212 = sphi 0, %s211
      %s226 = sphi 0, %s212
      %s230 = sphi 0, %s230
      %s232 = sphi 0, %s230
      %s233 = sphi 0, %s232
      %s247 = sphi 0, %s233
      %s251 = sphi 0, %s251
      %s253 = sphi 0, %s251
      %s254 = sphi 0, %s253
      %s268 = sphi 0, %s254
      %s272 = sphi 0, %s272
      %s274 = sphi 0, %s272
      %s275 = sphi 0, %s274
      %s289 = sphi 0, %s275
      %s293 = sphi 0, %s293
      %s295 = sphi 0, %s293
      %s296 = sphi 0, %s295
      %s310 = sphi 0, %s296
      %s314 = sphi 0, %s314
      %s316 = sphi 0, %s314
      %s317 = sphi 0, %s316
      %s331 = sphi 0, %s317
      %s335 = sphi 0, %s335
      %s337 = sphi 0, %s335
      %s338 = sphi 0, %s337
      %s352 = sphi 0, %s338
      %s356 = sphi 0, %s356
      %s358 = sphi 0, %s356
      %s359 = sphi 0, %s358
      %s373 = sphi 0, %s359
      %s377 = sphi 0, %s377
      %s379 = sphi 0, %s377
      %s380 = sphi 0, %s379
      %s394 = sphi 0, %s380
      %s402 = sphi 0, %s404
      %s405 = sphi 0, %s402
      %s406 = sphi 0, %s405
      %s422 = sphi 0, %s406
    $region4: #{tpu_custom_call.1} parent=1 // loop_header_branch
      %33 = sbr.rel (%p31) target = $region8
    $region5: #{tpu_custom_call.1} parent=1 // loop_body
      %s35 = ssub.s32 %s30, 1
      %s36 = ssub.s32 %s30, 2
      %s43 = sadd.s32 1, %s38
      %p44 = scmp.ge.s32.totalorder %s43, 1
      %s45 = scalar_select %p44, 0, %s43
      %s46 = sadd.s32 1, %s37
      %s47 = scalar_select %p44, %s46, %s37
      %p48 = scmp.ge.s32.totalorder %s47, 2
      %s49 = scalar_select %p48, 0, %s47
      %s50 = ssub.s32 %s37, %s49
      %s51 = ssub.s32 %s38, %s45
      %s52 = sor.u32 %s50, %s51
      %p53 = scmp.eq.s32.totalorder %s52, 0
      %s55 = sadd.s32 %s54, 1
      %s56 = scalar_select %p53, %s54, %s55
      %p59 = pneg %p53
      %p60 = scmp.eq.s32.totalorder %s30, 1
      %p61 = por %p59, %p60
      %p62 = scmp.ne.s32.totalorder %s54, %s57
      %p63 = scmp.eq.s32.totalorder %s30, 0
      %p64 = por %p62, %p63
      %p65 = scmp.ne.s32.totalorder %s54, %s57
      %p66 = scmp.eq.s32.totalorder %s35, 1
      %p67 = por %p65, %p66
      %p68 = scmp.ne.s32.totalorder %s57, %s58
      %p69 = scmp.eq.s32.totalorder %s35, 0
      %p70 = por %p68, %p69
      %p71 = scmp.ne.s32.totalorder %s57, %s58
      %p72 = scmp.eq.s32.totalorder %s36, 1
      %p73 = por %p71, %p72
      %p75 = scmp.ne.s32.totalorder %s58, %s74
      %p76 = scmp.eq.s32.totalorder %s36, 0
      %p77 = por %p75, %p76
      %s78 = ssub.s32 %s37, %s49
      %p79 = scmp.eq.s32.totalorder %s78, 0
      %s81 = sadd.s32 %s80, 1
      %s82 = scalar_select %p79, %s80, %s81
      %p85 = pneg %p79
      %p86 = scmp.eq.s32.totalorder %s30, 1
      %p87 = por %p85, %p86
      %p88 = scmp.ne.s32.totalorder %s80, %s83
      %p89 = scmp.eq.s32.totalorder %s30, 0
      %p90 = por %p88, %p89
      %p91 = scmp.ne.s32.totalorder %s80, %s83
      %p92 = scmp.eq.s32.totalorder %s35, 1
      %p93 = por %p91, %p92
      %p94 = scmp.ne.s32.totalorder %s83, %s84
      %p95 = scmp.eq.s32.totalorder %s35, 0
      %p96 = por %p94, %p95
      %p97 = scmp.ne.s32.totalorder %s83, %s84
      %p98 = scmp.eq.s32.totalorder %s36, 1
      %p99 = por %p97, %p98
      %p101 = scmp.ne.s32.totalorder %s84, %s100
      %p102 = scmp.eq.s32.totalorder %s36, 0
      %p103 = por %p101, %p102
      %s105 = sadd.s32 %s104, 1
      %p108 = scmp.eq.s32.totalorder %s30, 1
      %p109 = scmp.ne.s32.totalorder %s104, %s106
      %p110 = scmp.eq.s32.totalorder %s30, 0
      %p111 = por %p109, %p110
      %p112 = scmp.ne.s32.totalorder %s104, %s106
      %p113 = scmp.eq.s32.totalorder %s35, 1
      %p114 = por %p112, %p113
      %p115 = scmp.ne.s32.totalorder %s106, %s107
      %p116 = scmp.eq.s32.totalorder %s35, 0
      %p117 = por %p115, %p116
      %p118 = scmp.ne.s32.totalorder %s106, %s107
      %p119 = scmp.eq.s32.totalorder %s36, 1
      %p120 = por %p118, %p119
      %p122 = scmp.ne.s32.totalorder %s107, %s121
      %p123 = scmp.eq.s32.totalorder %s36, 0
      %p124 = por %p122, %p123
      %s126 = sadd.s32 %s125, 1
      %p129 = scmp.eq.s32.totalorder %s30, 1
      %p130 = scmp.ne.s32.totalorder %s125, %s127
      %p131 = scmp.eq.s32.totalorder %s30, 0
      %p132 = por %p130, %p131
      %p133 = scmp.ne.s32.totalorder %s125, %s127
      %p134 = scmp.eq.s32.totalorder %s35, 1
      %p135 = por %p133, %p134
      %p136 = scmp.ne.s32.totalorder %s127, %s128
      %p137 = scmp.eq.s32.totalorder %s35, 0
      %p138 = por %p136, %p137
      %p139 = scmp.ne.s32.totalorder %s127, %s128
      %p140 = scmp.eq.s32.totalorder %s36, 1
      %p141 = por %p139, %p140
      %p143 = scmp.ne.s32.totalorder %s128, %s142
      %p144 = scmp.eq.s32.totalorder %s36, 0
      %p145 = por %p143, %p144
      %s147 = sadd.s32 %s146, 1
      %p150 = scmp.eq.s32.totalorder %s30, 1
      %p151 = scmp.ne.s32.totalorder %s146, %s148
      %p152 = scmp.eq.s32.totalorder %s30, 0
      %p153 = por %p151, %p152
      %p154 = scmp.ne.s32.totalorder %s146, %s148
      %p155 = scmp.eq.s32.totalorder %s35, 1
      %p156 = por %p154, %p155
      %p157 = scmp.ne.s32.totalorder %s148, %s149
      %p158 = scmp.eq.s32.totalorder %s35, 0
      %p159 = por %p157, %p158
      %p160 = scmp.ne.s32.totalorder %s148, %s149
      %p161 = scmp.eq.s32.totalorder %s36, 1
      %p162 = por %p160, %p161
      %p164 = scmp.ne.s32.totalorder %s149, %s163
      %p165 = scmp.eq.s32.totalorder %s36, 0
      %p166 = por %p164, %p165
      %s168 = sadd.s32 %s167, 1
      %p171 = scmp.eq.s32.totalorder %s30, 1
      %p172 = scmp.ne.s32.totalorder %s167, %s169
      %p173 = scmp.eq.s32.totalorder %s30, 0
      %p174 = por %p172, %p173
      %p175 = scmp.ne.s32.totalorder %s167, %s169
      %p176 = scmp.eq.s32.totalorder %s35, 1
      %p177 = por %p175, %p176
      %p178 = scmp.ne.s32.totalorder %s169, %s170
      %p179 = scmp.eq.s32.totalorder %s35, 0
      %p180 = por %p178, %p179
      %p181 = scmp.ne.s32.totalorder %s169, %s170
      %p182 = scmp.eq.s32.totalorder %s36, 1
      %p183 = por %p181, %p182
      %p185 = scmp.ne.s32.totalorder %s170, %s184
      %p186 = scmp.eq.s32.totalorder %s36, 0
      %p187 = por %p185, %p186
      %s189 = sadd.s32 %s188, 1
      %p192 = scmp.eq.s32.totalorder %s30, 1
      %p193 = scmp.ne.s32.totalorder %s188, %s190
      %p194 = scmp.eq.s32.totalorder %s30, 0
      %p195 = por %p193, %p194
      %p196 = scmp.ne.s32.totalorder %s188, %s190
      %p197 = scmp.eq.s32.totalorder %s35, 1
      %p198 = por %p196, %p197
      %p199 = scmp.ne.s32.totalorder %s190, %s191
      %p200 = scmp.eq.s32.totalorder %s35, 0
      %p201 = por %p199, %p200
      %p202 = scmp.ne.s32.totalorder %s190, %s191
      %p203 = scmp.eq.s32.totalorder %s36, 1
      %p204 = por %p202, %p203
      %p206 = scmp.ne.s32.totalorder %s191, %s205
      %p207 = scmp.eq.s32.totalorder %s36, 0
      %p208 = por %p206, %p207
      %s210 = sadd.s32 %s209, 1
      %p213 = scmp.eq.s32.totalorder %s30, 1
      %p214 = scmp.ne.s32.totalorder %s209, %s211
      %p215 = scmp.eq.s32.totalorder %s30, 0
      %p216 = por %p214, %p215
      %p217 = scmp.ne.s32.totalorder %s209, %s211
      %p218 = scmp.eq.s32.totalorder %s35, 1
      %p219 = por %p217, %p218
      %p220 = scmp.ne.s32.totalorder %s211, %s212
      %p221 = scmp.eq.s32.totalorder %s35, 0
      %p222 = por %p220, %p221
      %p223 = scmp.ne.s32.totalorder %s211, %s212
      %p224 = scmp.eq.s32.totalorder %s36, 1
      %p225 = por %p223, %p224
      %p227 = scmp.ne.s32.totalorder %s212, %s226
      %p228 = scmp.eq.s32.totalorder %s36, 0
      %p229 = por %p227, %p228
      %s231 = sadd.s32 %s230, 1
      %p234 = scmp.eq.s32.totalorder %s30, 1
      %p235 = scmp.ne.s32.totalorder %s230, %s232
      %p236 = scmp.eq.s32.totalorder %s30, 0
      %p237 = por %p235, %p236
      %p238 = scmp.ne.s32.totalorder %s230, %s232
      %p239 = scmp.eq.s32.totalorder %s35, 1
      %p240 = por %p238, %p239
      %p241 = scmp.ne.s32.totalorder %s232, %s233
      %p242 = scmp.eq.s32.totalorder %s35, 0
      %p243 = por %p241, %p242
      %p244 = scmp.ne.s32.totalorder %s232, %s233
      %p245 = scmp.eq.s32.totalorder %s36, 1
      %p246 = por %p244, %p245
      %p248 = scmp.ne.s32.totalorder %s233, %s247
      %p249 = scmp.eq.s32.totalorder %s36, 0
      %p250 = por %p248, %p249
      %s252 = sadd.s32 %s251, 1
      %p255 = scmp.eq.s32.totalorder %s30, 1
      %p256 = scmp.ne.s32.totalorder %s251, %s253
      %p257 = scmp.eq.s32.totalorder %s30, 0
      %p258 = por %p256, %p257
      %p259 = scmp.ne.s32.totalorder %s251, %s253
      %p260 = scmp.eq.s32.totalorder %s35, 1
      %p261 = por %p259, %p260
      %p262 = scmp.ne.s32.totalorder %s253, %s254
      %p263 = scmp.eq.s32.totalorder %s35, 0
      %p264 = por %p262, %p263
      %p265 = scmp.ne.s32.totalorder %s253, %s254
      %p266 = scmp.eq.s32.totalorder %s36, 1
      %p267 = por %p265, %p266
      %p269 = scmp.ne.s32.totalorder %s254, %s268
      %p270 = scmp.eq.s32.totalorder %s36, 0
      %p271 = por %p269, %p270
      %s273 = sadd.s32 %s272, 1
      %p276 = scmp.eq.s32.totalorder %s30, 1
      %p277 = scmp.ne.s32.totalorder %s272, %s274
      %p278 = scmp.eq.s32.totalorder %s30, 0
      %p279 = por %p277, %p278
      %p280 = scmp.ne.s32.totalorder %s272, %s274
      %p281 = scmp.eq.s32.totalorder %s35, 1
      %p282 = por %p280, %p281
      %p283 = scmp.ne.s32.totalorder %s274, %s275
      %p284 = scmp.eq.s32.totalorder %s35, 0
      %p285 = por %p283, %p284
      %p286 = scmp.ne.s32.totalorder %s274, %s275
      %p287 = scmp.eq.s32.totalorder %s36, 1
      %p288 = por %p286, %p287
      %p290 = scmp.ne.s32.totalorder %s275, %s289
      %p291 = scmp.eq.s32.totalorder %s36, 0
      %p292 = por %p290, %p291
      %s294 = sadd.s32 %s293, 1
      %p297 = scmp.eq.s32.totalorder %s30, 1
      %p298 = scmp.ne.s32.totalorder %s293, %s295
      %p299 = scmp.eq.s32.totalorder %s30, 0
      %p300 = por %p298, %p299
      %p301 = scmp.ne.s32.totalorder %s293, %s295
      %p302 = scmp.eq.s32.totalorder %s35, 1
      %p303 = por %p301, %p302
      %p304 = scmp.ne.s32.totalorder %s295, %s296
      %p305 = scmp.eq.s32.totalorder %s35, 0
      %p306 = por %p304, %p305
      %p307 = scmp.ne.s32.totalorder %s295, %s296
      %p308 = scmp.eq.s32.totalorder %s36, 1
      %p309 = por %p307, %p308
      %p311 = scmp.ne.s32.totalorder %s296, %s310
      %p312 = scmp.eq.s32.totalorder %s36, 0
      %p313 = por %p311, %p312
      %s315 = sadd.s32 %s314, 1
      %p318 = scmp.eq.s32.totalorder %s30, 1
      %p319 = scmp.ne.s32.totalorder %s314, %s316
      %p320 = scmp.eq.s32.totalorder %s30, 0
      %p321 = por %p319, %p320
      %p322 = scmp.ne.s32.totalorder %s314, %s316
      %p323 = scmp.eq.s32.totalorder %s35, 1
      %p324 = por %p322, %p323
      %p325 = scmp.ne.s32.totalorder %s316, %s317
      %p326 = scmp.eq.s32.totalorder %s35, 0
      %p327 = por %p325, %p326
      %p328 = scmp.ne.s32.totalorder %s316, %s317
      %p329 = scmp.eq.s32.totalorder %s36, 1
      %p330 = por %p328, %p329
      %p332 = scmp.ne.s32.totalorder %s317, %s331
      %p333 = scmp.eq.s32.totalorder %s36, 0
      %p334 = por %p332, %p333
      %s336 = sadd.s32 %s335, 1
      %p339 = scmp.eq.s32.totalorder %s30, 1
      %p340 = scmp.ne.s32.totalorder %s335, %s337
      %p341 = scmp.eq.s32.totalorder %s30, 0
      %p342 = por %p340, %p341
      %p343 = scmp.ne.s32.totalorder %s335, %s337
      %p344 = scmp.eq.s32.totalorder %s35, 1
      %p345 = por %p343, %p344
      %p346 = scmp.ne.s32.totalorder %s337, %s338
      %p347 = scmp.eq.s32.totalorder %s35, 0
      %p348 = por %p346, %p347
      %p349 = scmp.ne.s32.totalorder %s337, %s338
      %p350 = scmp.eq.s32.totalorder %s36, 1
      %p351 = por %p349, %p350
      %p353 = scmp.ne.s32.totalorder %s338, %s352
      %p354 = scmp.eq.s32.totalorder %s36, 0
      %p355 = por %p353, %p354
      %s357 = sadd.s32 %s356, 1
      %p360 = scmp.eq.s32.totalorder %s30, 1
      %p361 = scmp.ne.s32.totalorder %s356, %s358
      %p362 = scmp.eq.s32.totalorder %s30, 0
      %p363 = por %p361, %p362
      %p364 = scmp.ne.s32.totalorder %s356, %s358
      %p365 = scmp.eq.s32.totalorder %s35, 1
      %p366 = por %p364, %p365
      %p367 = scmp.ne.s32.totalorder %s358, %s359
      %p368 = scmp.eq.s32.totalorder %s35, 0
      %p369 = por %p367, %p368
      %p370 = scmp.ne.s32.totalorder %s358, %s359
      %p371 = scmp.eq.s32.totalorder %s36, 1
      %p372 = por %p370, %p371
      %p374 = scmp.ne.s32.totalorder %s359, %s373
      %p375 = scmp.eq.s32.totalorder %s36, 0
      %p376 = por %p374, %p375
      %s378 = sadd.s32 %s377, 1
      %p381 = scmp.eq.s32.totalorder %s30, 1
      %p382 = scmp.ne.s32.totalorder %s377, %s379
      %p383 = scmp.eq.s32.totalorder %s30, 0
      %p384 = por %p382, %p383
      %p385 = scmp.ne.s32.totalorder %s377, %s379
      %p386 = scmp.eq.s32.totalorder %s35, 1
      %p387 = por %p385, %p386
      %p388 = scmp.ne.s32.totalorder %s379, %s380
      %p389 = scmp.eq.s32.totalorder %s35, 0
      %p390 = por %p388, %p389
      %p391 = scmp.ne.s32.totalorder %s379, %s380
      %p392 = scmp.eq.s32.totalorder %s36, 1
      %p393 = por %p391, %p392
      %p395 = scmp.ne.s32.totalorder %s380, %s394
      %p396 = scmp.eq.s32.totalorder %s36, 0
      %p397 = por %p395, %p396
      %s398 = ssub.s32 %s37, %s49
      %s399 = ssub.s32 %s38, %s45
      %s400 = sor.u32 %s398, %s399
      %p401 = scmp.eq.s32.totalorder %s400, 0
      %s403 = sadd.s32 %s402, 1
      %s404 = scalar_select %p401, %s402, %s403
      %p407 = pneg %p401
      %p408 = scmp.eq.s32.totalorder %s30, 1
      %p409 = por %p407, %p408
      %p410 = scmp.ne.s32.totalorder %s402, %s405
      %p411 = scmp.eq.s32.totalorder %s30, 0
      %p412 = por %p410, %p411
      %p413 = scmp.ne.s32.totalorder %s402, %s405
      %p414 = scmp.eq.s32.totalorder %s35, 1
      %p415 = por %p413, %p414
      %p416 = scmp.ne.s32.totalorder %s405, %s406
      %p417 = scmp.eq.s32.totalorder %s35, 0
      %p418 = por %p416, %p417
      %p419 = scmp.ne.s32.totalorder %s405, %s406
      %p420 = scmp.eq.s32.totalorder %s36, 1
      %p421 = por %p419, %p420
      %p423 = scmp.ne.s32.totalorder %s406, %s422
      %p424 = scmp.eq.s32.totalorder %s36, 0
      %p425 = por %p423, %p424
      %p426 = scmp.le.s32.totalorder 1, %s30
      %p427 = scmp.lt.s32.totalorder %s30, 3
      %p428 = pnand %p426, %p427
      %p429 = pneg %p428
      // Predicated region
      $region9: #{tpu_custom_call.1} parent=5 // pred_check
        _
      $region10: #{tpu_custom_call.1} parent=5 // pred_check_branch
        %431 = sbr.rel (%p428) target = $region12
      $region11: #{tpu_custom_call.1} parent=5 // pred_region
        %s432 = ssub.s32 %s30, 1
        // Predicated region
        $region13: #{tpu_custom_call.1} parent=11 // pred_check
          %p433 = pneg %p117
        $region14: #{tpu_custom_call.1} parent=11 // pred_check_branch
          %435 = sbr.rel (%p433) target = $region16
        $region15: #{tpu_custom_call.1} parent=11 // pred_region
          _
        $region16: #{tpu_custom_call.1} parent=11 // pred_fallthru
          _
        // Predicated region
        $region17: #{tpu_custom_call.1} parent=11 // pred_check
          %p436 = pneg %p138
        $region18: #{tpu_custom_call.1} parent=11 // pred_check_branch
          %438 = sbr.rel (%p436) target = $region20
        $region19: #{tpu_custom_call.1} parent=11 // pred_region
          _
        $region20: #{tpu_custom_call.1} parent=11 // pred_fallthru
          _
        // Predicated region
        $region21: #{tpu_custom_call.1} parent=11 // pred_check
          %p439 = pneg %p159
        $region22: #{tpu_custom_call.1} parent=11 // pred_check_branch
          %441 = sbr.rel (%p439) target = $region24
        $region23: #{tpu_custom_call.1} parent=11 // pred_region
          _
        $region24: #{tpu_custom_call.1} parent=11 // pred_fallthru
          _
        // Predicated region
        $region25: #{tpu_custom_call.1} parent=11 // pred_check
          %p442 = pneg %p180
        $region26: #{tpu_custom_call.1} parent=11 // pred_check_branch
          %444 = sbr.rel (%p442) target = $region28
        $region27: #{tpu_custom_call.1} parent=11 // pred_region
          _
        $region28: #{tpu_custom_call.1} parent=11 // pred_fallthru
          _
        // Predicated region
        $region29: #{tpu_custom_call.1} parent=11 // pred_check
          %p445 = pneg %p201
        $region30: #{tpu_custom_call.1} parent=11 // pred_check_branch
          %447 = sbr.rel (%p445) target = $region32
        $region31: #{tpu_custom_call.1} parent=11 // pred_region
          %s449 = ssub.s32 256, 256
          %450 = vsyncadd [#allocation8], %s449
          %s451 = sshll.u32 [#allocation7], 4
          %s452 = int_to_ptr.vmem [resolvable:$true] %s451
          %457 = dma.hbm_to_vmem [thread:$0]  %s6, 256, %s452, [#allocation8], 64, 64, 4
        $region32: #{tpu_custom_call.1} parent=11 // pred_fallthru
          _
        // Predicated region
        $region33: #{tpu_custom_call.1} parent=11 // pred_check
          %p458 = pneg %p222
        $region34: #{tpu_custom_call.1} parent=11 // pred_check_branch
          %460 = sbr.rel (%p458) target = $region36
        $region35: #{tpu_custom_call.1} parent=11 // pred_region
          %s462 = ssub.s32 16, 16
          %463 = vsyncadd [#allocation8], %s462
          %s465 = sshll.u32 [#allocation9], 4
          %s466 = int_to_ptr.vmem [resolvable:$true] %s465
          %468 = dma.hbm_to_vmem [thread:$0]  %s7, 16, %s466, [#allocation8]
        $region36: #{tpu_custom_call.1} parent=11 // pred_fallthru
          _
        // Predicated region
        $region37: #{tpu_custom_call.1} parent=11 // pred_check
          %p469 = pneg %p243
        $region38: #{tpu_custom_call.1} parent=11 // pred_check_branch
          %471 = sbr.rel (%p469) target = $region40
        $region39: #{tpu_custom_call.1} parent=11 // pred_region
          %s473 = ssub.s32 16, 16
          %474 = vsyncadd [#allocation11], %s473
          %s476 = sshll.u32 [#allocation10], 4
          %s477 = int_to_ptr.vmem [resolvable:$true] %s476
          %479 = dma.hbm_to_vmem [thread:$0]  %s8, 16, %s477, [#allocation11]
        $region40: #{tpu_custom_call.1} parent=11 // pred_fallthru
          _
        // Predicated region
        $region41: #{tpu_custom_call.1} parent=11 // pred_check
          %p480 = pneg %p264
        $region42: #{tpu_custom_call.1} parent=11 // pred_check_branch
          %482 = sbr.rel (%p480) target = $region44
        $region43: #{tpu_custom_call.1} parent=11 // pred_region
          %s484 = ssub.s32 16, 16
          %485 = vsyncadd [#allocation11], %s484
          %s487 = sshll.u32 [#allocation12], 4
          %s488 = int_to_ptr.vmem [resolvable:$true] %s487
          %490 = dma.hbm_to_vmem [thread:$0]  %s9, 16, %s488, [#allocation11]
        $region44: #{tpu_custom_call.1} parent=11 // pred_fallthru
          _
        // Predicated region
        $region45: #{tpu_custom_call.1} parent=11 // pred_check
          %p491 = pneg %p285
        $region46: #{tpu_custom_call.1} parent=11 // pred_check_branch
          %493 = sbr.rel (%p491) target = $region48
        $region47: #{tpu_custom_call.1} parent=11 // pred_region
          _
        $region48: #{tpu_custom_call.1} parent=11 // pred_fallthru
          _
        // Predicated region
        $region49: #{tpu_custom_call.1} parent=11 // pred_check
          %p494 = pneg %p306
        $region50: #{tpu_custom_call.1} parent=11 // pred_check_branch
          %496 = sbr.rel (%p494) target = $region52
        $region51: #{tpu_custom_call.1} parent=11 // pred_region
          _
        $region52: #{tpu_custom_call.1} parent=11 // pred_fallthru
          _
        // Predicated region
        $region53: #{tpu_custom_call.1} parent=11 // pred_check
          %p497 = pneg %p327
        $region54: #{tpu_custom_call.1} parent=11 // pred_check_branch
          %499 = sbr.rel (%p497) target = $region56
        $region55: #{tpu_custom_call.1} parent=11 // pred_region
          _
        $region56: #{tpu_custom_call.1} parent=11 // pred_fallthru
          _
        // Predicated region
        $region57: #{tpu_custom_call.1} parent=11 // pred_check
          %p500 = pneg %p348
        $region58: #{tpu_custom_call.1} parent=11 // pred_check_branch
          %502 = sbr.rel (%p500) target = $region60
        $region59: #{tpu_custom_call.1} parent=11 // pred_region
          _
        $region60: #{tpu_custom_call.1} parent=11 // pred_fallthru
          _
        // Predicated region
        $region61: #{tpu_custom_call.1} parent=11 // pred_check
          %p503 = pneg %p369
        $region62: #{tpu_custom_call.1} parent=11 // pred_check_branch
          %505 = sbr.rel (%p503) target = $region64
        $region63: #{tpu_custom_call.1} parent=11 // pred_region
          _
        $region64: #{tpu_custom_call.1} parent=11 // pred_fallthru
          _
        // Predicated region
        $region65: #{tpu_custom_call.1} parent=11 // pred_check
          %p506 = pneg %p390
        $region66: #{tpu_custom_call.1} parent=11 // pred_check_branch
          %508 = sbr.rel (%p506) target = $region68
        $region67: #{tpu_custom_call.1} parent=11 // pred_region
          _
        $region68: #{tpu_custom_call.1} parent=11 // pred_fallthru
          _
      $region12: #{tpu_custom_call.1} parent=5 // pred_fallthru
        _
      %p509 = scmp.lt.s32.totalorder %s30, 2
      // Predicated region
      $region69: #{tpu_custom_call.1} parent=5 // pred_check
        %p510 = pneg %p509
      $region70: #{tpu_custom_call.1} parent=5 // pred_check_branch
        %512 = sbr.rel (%p510) target = $region72
      $region71: #{tpu_custom_call.1} parent=5 // pred_region
        // Predicated region
        $region73: #{tpu_custom_call.1} parent=71 // pred_check
          %p513 = pneg %p64
        $region74: #{tpu_custom_call.1} parent=71 // pred_check_branch
          %515 = sbr.rel (%p513) target = $region76
        $region75: #{tpu_custom_call.1} parent=71 // pred_region
          %p516 = scmp.lt.s32.totalorder %s37, 1
          %s517 = scalar_select %p516, %s37, 1
          %p518 = scmp.lt.s32.totalorder %s38, 0
          %s519 = scalar_select %p518, %s38, 0
          %s520 = sadd.s32 %s519, %s517
          %s521 = smul.addr %s520, 8
          %s522 = scalar_lea.vmem %s0, %s521
        $region76: #{tpu_custom_call.1} parent=71 // pred_fallthru
          _
        // Predicated region
        $region77: #{tpu_custom_call.1} parent=71 // pred_check
          %p523 = pneg %p90
        $region78: #{tpu_custom_call.1} parent=71 // pred_check_branch
          %525 = sbr.rel (%p523) target = $region80
        $region79: #{tpu_custom_call.1} parent=71 // pred_region
          %s526 = sand.u32 %s80, 1
          %s527 = scalar_lea.sflag [#allocation5], %s526
          %s528 = sand.u32 %s80, 1
          %s529 = smul.addr %s528, 4
          %s530 = scalar_lea.vmem [#allocation4], %s529
          %s532 = ssub.s32 64, 64
          %533 = vsyncadd %s527, %s532
          %s534 = smul.addr %s37, 64
          %s535 = scalar_lea.hbm %s1, %s534
          %s537 = sshll.u32 %s530, 4
          %s538 = int_to_ptr.vmem [resolvable:$true] %s537
          %540 = dma.hbm_to_vmem [thread:$0]  %s535, 64, %s538, %s527
        $region80: #{tpu_custom_call.1} parent=71 // pred_fallthru
          _
      $region72: #{tpu_custom_call.1} parent=5 // pred_fallthru
        _
      %p541 = scmp.le.s32.totalorder 1, %s30
      %p542 = scmp.lt.s32.totalorder %s30, 3
      %p543 = pnand %p541, %p542
      %p544 = pneg %p543
      // Predicated region
      $region81: #{tpu_custom_call.1} parent=5 // pred_check
        _
      $region82: #{tpu_custom_call.1} parent=5 // pred_check_branch
        %546 = sbr.rel (%p543) target = $region84
      $region83: #{tpu_custom_call.1} parent=5 // pred_region
        %s547 = ssub.s32 %s30, 1
        %s548 = sand.u32 %s83, 1
        %s549 = scalar_lea.sflag [#allocation5], %s548
        %s550 = sand.u32 %s83, 1
        %s551 = smul.addr %s550, 4
        %s552 = scalar_lea.vmem [#allocation4], %s551
        // Predicated region
        $region85: #{tpu_custom_call.1} parent=83 // pred_check
          %p553 = pneg %p96
        $region86: #{tpu_custom_call.1} parent=83 // pred_check_branch
          %555 = sbr.rel (%p553) target = $region88
        $region87: #{tpu_custom_call.1} parent=83 // pred_region
          %556 = dma.done %s549, 64
        $region88: #{tpu_custom_call.1} parent=83 // pred_fallthru
          _
        // Predicated region
        $region89: #{tpu_custom_call.1} parent=83 // pred_check
          %p557 = pneg %p201
        $region90: #{tpu_custom_call.1} parent=83 // pred_check_branch
          %559 = sbr.rel (%p557) target = $region92
        $region91: #{tpu_custom_call.1} parent=83 // pred_region
          %560 = dma.done [#allocation8], 256
        $region92: #{tpu_custom_call.1} parent=83 // pred_fallthru
          _
        // Predicated region
        $region93: #{tpu_custom_call.1} parent=83 // pred_check
          %p561 = pneg %p222
        $region94: #{tpu_custom_call.1} parent=83 // pred_check_branch
          %563 = sbr.rel (%p561) target = $region96
        $region95: #{tpu_custom_call.1} parent=83 // pred_region
          %564 = dma.done [#allocation8], 16
        $region96: #{tpu_custom_call.1} parent=83 // pred_fallthru
          _
        // Predicated region
        $region97: #{tpu_custom_call.1} parent=83 // pred_check
          %p565 = pneg %p243
        $region98: #{tpu_custom_call.1} parent=83 // pred_check_branch
          %567 = sbr.rel (%p565) target = $region100
        $region99: #{tpu_custom_call.1} parent=83 // pred_region
          %568 = dma.done [#allocation11], 16
        $region100: #{tpu_custom_call.1} parent=83 // pred_fallthru
          _
        // Predicated region
        $region101: #{tpu_custom_call.1} parent=83 // pred_check
          %p569 = pneg %p264
        $region102: #{tpu_custom_call.1} parent=83 // pred_check_branch
          %571 = sbr.rel (%p569) target = $region104
        $region103: #{tpu_custom_call.1} parent=83 // pred_region
          %572 = dma.done [#allocation11], 16
        $region104: #{tpu_custom_call.1} parent=83 // pred_fallthru
          _
        %p573 = scmp.lt.s32.totalorder %s39, 1
        %s574 = scalar_select %p573, %s39, 1
        %p575 = scmp.lt.s32.totalorder %s40, 0
        %s576 = scalar_select %p575, %s40, 0
        %s577 = sadd.s32 %s576, %s574
        %s578 = smul.addr %s577, 8
        %s579 = scalar_lea.vmem %s0, %s578
        %p580 = pneg %p70
        %p581 = pneg %p67
        %s582 = sand.u32 %s83, 1
        %s583 = scalar_lea.sflag [#allocation5], %s582
        %s584 = sand.u32 %s83, 1
        %s585 = smul.addr %s584, 4
        %s586 = scalar_lea.vmem [#allocation4], %s585
        %p587 = pneg %p96
        %p588 = pneg %p93
        %p589 = pneg %p117
        %p590 = pneg %p114
        %p591 = pneg %p138
        %p592 = pneg %p135
        %p593 = pneg %p159
        %p594 = pneg %p156
        %p595 = pneg %p180
        %p596 = pneg %p177
        %p597 = pneg %p201
        %p598 = pneg %p198
        %p599 = pneg %p222
        %p600 = pneg %p219
        %p601 = pneg %p243
        %p602 = pneg %p240
        %p603 = pneg %p264
        %p604 = pneg %p261
        %p605 = pneg %p285
        %p606 = pneg %p282
        %p607 = pneg %p306
        %p608 = pneg %p303
        %p609 = pneg %p327
        %p610 = pneg %p324
        %p611 = pneg %p348
        %p612 = pneg %p345
        %p613 = pneg %p369
        %p614 = pneg %p366
        %p615 = pneg %p390
        %p616 = pneg %p387
        %p617 = pneg %p418
        %p618 = pneg %p415
        %s619 = sand.u32 %s405, 1
        %s620 = scalar_lea.sflag [#allocation6], %s619
        %s621 = sand.u32 %s405, 1
        %s622 = smul.addr %s621, 8
        %s623 = scalar_lea.vmem [#allocation13], %s622
        %p624 = scmp.lt.s32.totalorder %s39, 1
        %s625 = scalar_select %p624, %s39, 1
        %p626 = scmp.lt.s32.totalorder %s40, 0
        %s627 = scalar_select %p626, %s40, 0
        %s628 = sadd.s32 %s627, %s625
        %s629 = smul.addr %s628, 8
        %s630 = scalar_lea.vmem %s0, %s629
        %p632 = scmp.eq.s32.totalorder %s40, 0
        // Predicated region
        $region105: #{tpu_custom_call.1} parent=83 // pred_check
          %p633 = pneg %p632
        $region106: #{tpu_custom_call.1} parent=83 // pred_check_branch
          %635 = sbr.rel (%p633) target = $region108
        $region107: #{tpu_custom_call.1} parent=83 // pred_region
          %v636 = vld [vmem:[%s552] sm:$0xf]
          %v637 = vld [vmem:[%s4] sm:$0xf]
          %v638 = vld [vmem:[%s4 + $0x4] sm:$0xf]
          %v639 = vld [vmem:[%s4 + $0x8] sm:$0xf]
          %v640 = vld [vmem:[%s4 + $0xc] sm:$0xf]
          %v641 = vld [vmem:[%s5] sm:$0x1]
          %v643 = vlaneseq
          %v644 = vshrl.u32 %v643, 7
          %v645 = vsub.s32 0, %v644
          %v646 = vrot.slane %v641, %v645
          %v652 = vunpack.c.l.b16 %v637
          %v653 = vunpack.c.l.b16 %v638
          %v654 = vunpack.c.l.b16 %v639
          %v655 = vunpack.c.l.b16 %v640
          %v656 = vpack.c.b16 %v653, %v652
          %v657 = vpack.c.b16 %v655, %v654
          %vm660 = vcmask 261120
          %v662 = vsel %vm660, %v636, 0
          %664 = vmatprep.subr.bf16.mxu0 0
          %665 = vmatpush1.bf16.msra.mxu0 %v656
          %666 = vmatprep.subr.bf16.mxu0 0
          %667 = vmatpush1.bf16.msra.mxu0 %v657
          %668 = vmatprep.subr.bf16.mxu0 0
          %669 = vmatpush1.bf16.msra.mxu0 0
          %670 = vmatprep.subr.bf16.mxu0 0
          %671 = vmatpush1.bf16.msra.mxu0 0
          %672 = vmatprep.subr.bf16.mxu0 0
          %673 = vmatpush1.bf16.msra.mxu0 0
          %674 = vmatprep.subr.bf16.mxu0 0
          %675 = vmatpush1.bf16.msra.mxu0 0
          %676 = vmatprep.subr.bf16.mxu0 0
          %677 = vmatpush1.bf16.msra.mxu0 0
          %678 = vmatprep.subr.bf16.mxu0 0
          %679 = vmatpush1.bf16.msra.mxu0 0
          %680 = vmatprep.subr.bf16.mxu0 0
          %681 = vmatpush1.bf16.msra.mxu0 0
          %682 = vmatprep.subr.bf16.mxu0 0
          %683 = vmatpush1.bf16.msra.mxu0 0
          %684 = vmatprep.subr.bf16.mxu0 0
          %685 = vmatpush1.bf16.msra.mxu0 0
          %686 = vmatprep.subr.bf16.mxu0 0
          %687 = vmatpush1.bf16.msra.mxu0 0
          %688 = vmatprep.subr.bf16.mxu0 0
          %689 = vmatpush1.bf16.msra.mxu0 0
          %690 = vmatprep.subr.bf16.mxu0 0
          %691 = vmatpush1.bf16.msra.mxu0 0
          %692 = vmatprep.subr.bf16.mxu0 0
          %693 = vmatpush1.bf16.msra.mxu0 0
          %694 = vmatprep.subr.bf16.mxu0 0
          %695 = vmatpush1.bf16.msra.mxu0 0
          %696 = vmatprep.mubr.bf16.mxu0 0
          %697 = vmatmul.mubr.bf16.gmra.mrb[0].mxu0 %v662
          %v698 = vpop.f32.mrb[0].mxu0
          %v699 = vadd.f32 %v646, %v698
          %v700 = vpop.f32.mrb[0].mxu0
          %v701 = vpop.f32.mrb[0].mxu0
          %v702 = vpop.f32.mrb[0].mxu0
          %703 = vdwg.mxu0
          %v704 = vpack.c.bf16 %v699, %v699
          %vm705 = vcmask 257024
          %706 = vst.msk [vmem:[#allocation2] sm:$0xf] %vm705, %v704
          %v708 = vunpack.c.l.b16 %v704
          %v709 = vpack.c.b16 %v708, %v708
          %710 = vrot.lane.b32.xlu0 %v709, 96
          %v711 = vpop.permute.xlu0 %710
          %s713 = scalar_lea.vmem [#allocation2], 4
          %714 = vst.msk [vmem:[%s713] sm:$0xf] %vm705, %v711
        $region108: #{tpu_custom_call.1} parent=83 // pred_fallthru
          _
        %v715 = vld [vmem:[%s630] sm:$0xff]
        %v716 = vpack.c.bf16 %v715, %v715
        %v717 = vld [vmem:[%s2] sm:$0xf]
        %v718 = vld [vmem:[%s2 + $0x4] sm:$0xf]
        %v719 = vld [vmem:[%s2 + $0x8] sm:$0xf]
        %v720 = vld [vmem:[%s2 + $0xc] sm:$0xf]
        %v721 = vld [vmem:[%s3] sm:$0x1]
        %v723 = vlaneseq
        %v724 = vshrl.u32 %v723, 7
        %v725 = vsub.s32 0, %v724
        %v726 = vrot.slane %v721, %v725
        %v732 = vunpack.c.l.b16 %v717
        %v733 = vunpack.c.l.b16 %v718
        %v734 = vunpack.c.l.b16 %v719
        %v735 = vunpack.c.l.b16 %v720
        %v736 = vpack.c.b16 %v733, %v732
        %v737 = vpack.c.b16 %v735, %v734
        %vm740 = vcmask 261120
        %v742 = vsel %vm740, %v716, 0
        %744 = vmatprep.subr.bf16.mxu0 0
        %745 = vmatpush1.bf16.msra.mxu0 %v736
        %746 = vmatprep.subr.bf16.mxu0 0
        %747 = vmatpush1.bf16.msra.mxu0 %v737
        %748 = vmatprep.subr.bf16.mxu0 0
        %749 = vmatpush1.bf16.msra.mxu0 0
        %750 = vmatprep.subr.bf16.mxu0 0
        %751 = vmatpush1.bf16.msra.mxu0 0
        %752 = vmatprep.subr.bf16.mxu0 0
        %753 = vmatpush1.bf16.msra.mxu0 0
        %754 = vmatprep.subr.bf16.mxu0 0
        %755 = vmatpush1.bf16.msra.mxu0 0
        %756 = vmatprep.subr.bf16.mxu0 0
        %757 = vmatpush1.bf16.msra.mxu0 0
        %758 = vmatprep.subr.bf16.mxu0 0
        %759 = vmatpush1.bf16.msra.mxu0 0
        %760 = vmatprep.subr.bf16.mxu0 0
        %761 = vmatpush1.bf16.msra.mxu0 0
        %762 = vmatprep.subr.bf16.mxu0 0
        %763 = vmatpush1.bf16.msra.mxu0 0
        %764 = vmatprep.subr.bf16.mxu0 0
        %765 = vmatpush1.bf16.msra.mxu0 0
        %766 = vmatprep.subr.bf16.mxu0 0
        %767 = vmatpush1.bf16.msra.mxu0 0
        %768 = vmatprep.subr.bf16.mxu0 0
        %769 = vmatpush1.bf16.msra.mxu0 0
        %770 = vmatprep.subr.bf16.mxu0 0
        %771 = vmatpush1.bf16.msra.mxu0 0
        %772 = vmatprep.subr.bf16.mxu0 0
        %773 = vmatpush1.bf16.msra.mxu0 0
        %774 = vmatprep.subr.bf16.mxu0 0
        %775 = vmatpush1.bf16.msra.mxu0 0
        %776 = vmatprep.mubr.bf16.mxu0 0
        %777 = vmatmul.mubr.bf16.gmra.mrb[0].mxu0 %v742
        %v778 = vpop.f32.mrb[0].mxu0
        %v779 = vadd.f32 %v726, %v778
        %v780 = vpop.f32.mrb[0].mxu0
        %v781 = vpop.f32.mrb[0].mxu0
        %v782 = vpop.f32.mrb[0].mxu0
        %783 = vdwg.mxu0
        %v784 = vld [vmem:[#allocation2] sm:$0xf]
        %s785 = scalar_lea.vmem [#allocation2], 4
        %v786 = vld [vmem:[%s785] sm:$0xf]
        %v787 = vpack.c.bf16 %v779, %v779
        %vm788 = vcmask 64512
        %v790 = vsel %vm788, %v787, 0
        %v793 = vsel %vm788, %v784, 0
        %795 = vmatprep.subr.bf16.mxu0 0
        %796 = vmatpush1.bf16.xpose.msra.mxu0 %v793
        %797 = vmatprep.subr.bf16.mxu0 0
        %798 = vmatpush1.bf16.xpose.msra.mxu0 0
        %799 = vmatprep.subr.bf16.mxu0 0
        %800 = vmatpush1.bf16.xpose.msra.mxu0 0
        %801 = vmatprep.subr.bf16.mxu0 0
        %802 = vmatpush1.bf16.xpose.msra.mxu0 0
        %803 = vmatprep.subr.bf16.mxu0 0
        %804 = vmatpush1.bf16.xpose.msra.mxu0 0
        %805 = vmatprep.subr.bf16.mxu0 0
        %806 = vmatpush1.bf16.xpose.msra.mxu0 0
        %807 = vmatprep.subr.bf16.mxu0 0
        %808 = vmatpush1.bf16.xpose.msra.mxu0 0
        %809 = vmatprep.subr.bf16.mxu0 0
        %810 = vmatpush1.bf16.xpose.msra.mxu0 0
        %811 = vmatprep.subr.bf16.mxu0 0
        %812 = vmatpush1.bf16.xpose.msra.mxu0 0
        %813 = vmatprep.subr.bf16.mxu0 0
        %814 = vmatpush1.bf16.xpose.msra.mxu0 0
        %815 = vmatprep.subr.bf16.mxu0 0
        %816 = vmatpush1.bf16.xpose.msra.mxu0 0
        %817 = vmatprep.subr.bf16.mxu0 0
        %818 = vmatpush1.bf16.xpose.msra.mxu0 0
        %819 = vmatprep.subr.bf16.mxu0 0
        %820 = vmatpush1.bf16.xpose.msra.mxu0 0
        %821 = vmatprep.subr.bf16.mxu0 0
        %822 = vmatpush1.bf16.xpose.msra.mxu0 0
        %823 = vmatprep.subr.bf16.mxu0 0
        %824 = vmatpush1.bf16.xpose.msra.mxu0 0
        %825 = vmatprep.subr.bf16.mxu0 0
        %826 = vmatpush1.bf16.xpose.msra.mxu0 0
        %827 = vmatprep.mubr.bf16.mxu0 0
        %828 = vmatmul.mubr.bf16.gmra.mrb[0].mxu0 %v790
        %v829 = vpop.f32.mrb[0].mxu0
        %v830 = vadd.f32 0.0, %v829
        %v831 = vpop.f32.mrb[0].mxu0
        %v832 = vpop.f32.mrb[0].mxu0
        %v833 = vpop.f32.mrb[0].mxu0
        %834 = vdwg.mxu0
        %v835 = vsel %vm788, %v830, -inf
        %836 = vmax.xlane.f32.xlu0 %v835
        %v837 = vpop.xlane.xlu0 %836
        %v838 = vsub.f32 %v830, %v837
        %v839 = vmul.f32 %v838, 1.442695
        %v840 = vpow.pop %v839
        %v841 = vsel %vm788, %v840, 0.0
        %842 = vadd.xlane.f32.xlu0 %v841
        %v843 = vpop.xlane.xlu0 %842
        %v844 = vpack.c.bf16 %v840, %v840
        %v846 = vsel %vm788, %v844, 0
        %vm848 = vcmask 1043456
        %v850 = vsel %vm848, %v786, 0
        %852 = vmatprep.subr.bf16.mxu0 0
        %853 = vmatpush1.bf16.msra.mxu0 %v850
        %854 = vmatprep.subr.bf16.mxu0 0
        %855 = vmatpush1.bf16.msra.mxu0 0
        %856 = vmatprep.subr.bf16.mxu0 0
        %857 = vmatpush1.bf16.msra.mxu0 0
        %858 = vmatprep.subr.bf16.mxu0 0
        %859 = vmatpush1.bf16.msra.mxu0 0
        %860 = vmatprep.subr.bf16.mxu0 0
        %861 = vmatpush1.bf16.msra.mxu0 0
        %862 = vmatprep.subr.bf16.mxu0 0
        %863 = vmatpush1.bf16.msra.mxu0 0
        %864 = vmatprep.subr.bf16.mxu0 0
        %865 = vmatpush1.bf16.msra.mxu0 0
        %866 = vmatprep.subr.bf16.mxu0 0
        %867 = vmatpush1.bf16.msra.mxu0 0
        %868 = vmatprep.subr.bf16.mxu0 0
        %869 = vmatpush1.bf16.msra.mxu0 0
        %870 = vmatprep.subr.bf16.mxu0 0
        %871 = vmatpush1.bf16.msra.mxu0 0
        %872 = vmatprep.subr.bf16.mxu0 0
        %873 = vmatpush1.bf16.msra.mxu0 0
        %874 = vmatprep.subr.bf16.mxu0 0
        %875 = vmatpush1.bf16.msra.mxu0 0
        %876 = vmatprep.subr.bf16.mxu0 0
        %877 = vmatpush1.bf16.msra.mxu0 0
        %878 = vmatprep.subr.bf16.mxu0 0
        %879 = vmatpush1.bf16.msra.mxu0 0
        %880 = vmatprep.subr.bf16.mxu0 0
        %881 = vmatpush1.bf16.msra.mxu0 0
        %882 = vmatprep.subr.bf16.mxu0 0
        %883 = vmatpush1.bf16.msra.mxu0 0
        %884 = vmatprep.mubr.bf16.mxu0 0
        %885 = vmatmul.mubr.bf16.gmra.mrb[0].mxu0 %v846
        %v886 = vpop.f32.mrb[0].mxu0
        %v887 = vadd.f32 0.0, %v886
        %v888 = vpop.f32.mrb[0].mxu0
        %v889 = vpop.f32.mrb[0].mxu0
        %v890 = vpop.f32.mrb[0].mxu0
        %891 = vdwg.mxu0
        %v892 = vrcp.pop %v843
        %v893 = vmul.f32 %v887, %v892
        %v894 = vpack.c.bf16 %v893, %v893
        %vm895 = vcmask 60416
        %896 = vst.msk [vmem:[#allocation3] sm:$0xf] %vm895, %v894
        %898 = vrot.lane.b32.xlu0 %v787, 120
        %v899 = vpop.permute.xlu0 %898
        %v901 = vunpack.c.l.b16 %v784
        %v902 = vpack.c.b16 %v901, %v901
        %903 = vrot.lane.b32.xlu0 %v902, 120
        %v904 = vpop.permute.xlu0 %903
        %v906 = vsel %vm788, %v899, 0
        %v909 = vsel %vm788, %v904, 0
        %911 = vmatprep.subr.bf16.mxu0 0
        %912 = vmatpush1.bf16.xpose.msra.mxu0 %v909
        %913 = vmatprep.subr.bf16.mxu0 0
        %914 = vmatpush1.bf16.xpose.msra.mxu0 0
        %915 = vmatprep.subr.bf16.mxu0 0
        %916 = vmatpush1.bf16.xpose.msra.mxu0 0
        %917 = vmatprep.subr.bf16.mxu0 0
        %918 = vmatpush1.bf16.xpose.msra.mxu0 0
        %919 = vmatprep.subr.bf16.mxu0 0
        %920 = vmatpush1.bf16.xpose.msra.mxu0 0
        %921 = vmatprep.subr.bf16.mxu0 0
        %922 = vmatpush1.bf16.xpose.msra.mxu0 0
        %923 = vmatprep.subr.bf16.mxu0 0
        %924 = vmatpush1.bf16.xpose.msra.mxu0 0
        %925 = vmatprep.subr.bf16.mxu0 0
        %926 = vmatpush1.bf16.xpose.msra.mxu0 0
        %927 = vmatprep.subr.bf16.mxu0 0
        %928 = vmatpush1.bf16.xpose.msra.mxu0 0
        %929 = vmatprep.subr.bf16.mxu0 0
        %930 = vmatpush1.bf16.xpose.msra.mxu0 0
        %931 = vmatprep.subr.bf16.mxu0 0
        %932 = vmatpush1.bf16.xpose.msra.mxu0 0
        %933 = vmatprep.subr.bf16.mxu0 0
        %934 = vmatpush1.bf16.xpose.msra.mxu0 0
        %935 = vmatprep.subr.bf16.mxu0 0
        %936 = vmatpush1.bf16.xpose.msra.mxu0 0
        %937 = vmatprep.subr.bf16.mxu0 0
        %938 = vmatpush1.bf16.xpose.msra.mxu0 0
        %939 = vmatprep.subr.bf16.mxu0 0
        %940 = vmatpush1.bf16.xpose.msra.mxu0 0
        %941 = vmatprep.subr.bf16.mxu0 0
        %942 = vmatpush1.bf16.xpose.msra.mxu0 0
        %943 = vmatprep.mubr.bf16.mxu0 0
        %944 = vmatmul.mubr.bf16.gmra.mrb[0].mxu0 %v906
        %v945 = vpop.f32.mrb[0].mxu0
        %v946 = vadd.f32 0.0, %v945
        %v947 = vpop.f32.mrb[0].mxu0
        %v948 = vpop.f32.mrb[0].mxu0
        %v949 = vpop.f32.mrb[0].mxu0
        %950 = vdwg.mxu0
        %v951 = vsel %vm788, %v946, -inf
        %952 = vmax.xlane.f32.xlu0 %v951
        %v953 = vpop.xlane.xlu0 %952
        %v954 = vsub.f32 %v946, %v953
        %v955 = vmul.f32 %v954, 1.442695
        %v956 = vpow.pop %v955
        %v957 = vsel %vm788, %v956, 0.0
        %958 = vadd.xlane.f32.xlu0 %v957
        %v959 = vpop.xlane.xlu0 %958
        %v960 = vpack.c.bf16 %v956, %v956
        %v962 = vunpack.c.l.b16 %v786
        %v963 = vpack.c.b16 %v962, %v962
        %964 = vrot.lane.b32.xlu0 %v963, 120
        %v965 = vpop.permute.xlu0 %964
        %v967 = vsel %vm788, %v960, 0
        %v970 = vsel %vm848, %v965, 0
        %972 = vmatprep.subr.bf16.mxu0 0
        %973 = vmatpush1.bf16.msra.mxu0 %v970
        %974 = vmatprep.subr.bf16.mxu0 0
        %975 = vmatpush1.bf16.msra.mxu0 0
        %976 = vmatprep.subr.bf16.mxu0 0
        %977 = vmatpush1.bf16.msra.mxu0 0
        %978 = vmatprep.subr.bf16.mxu0 0
        %979 = vmatpush1.bf16.msra.mxu0 0
        %980 = vmatprep.subr.bf16.mxu0 0
        %981 = vmatpush1.bf16.msra.mxu0 0
        %982 = vmatprep.subr.bf16.mxu0 0
        %983 = vmatpush1.bf16.msra.mxu0 0
        %984 = vmatprep.subr.bf16.mxu0 0
        %985 = vmatpush1.bf16.msra.mxu0 0
        %986 = vmatprep.subr.bf16.mxu0 0
        %987 = vmatpush1.bf16.msra.mxu0 0
        %988 = vmatprep.subr.bf16.mxu0 0
        %989 = vmatpush1.bf16.msra.mxu0 0
        %990 = vmatprep.subr.bf16.mxu0 0
        %991 = vmatpush1.bf16.msra.mxu0 0
        %992 = vmatprep.subr.bf16.mxu0 0
        %993 = vmatpush1.bf16.msra.mxu0 0
        %994 = vmatprep.subr.bf16.mxu0 0
        %995 = vmatpush1.bf16.msra.mxu0 0
        %996 = vmatprep.subr.bf16.mxu0 0
        %997 = vmatpush1.bf16.msra.mxu0 0
        %998 = vmatprep.subr.bf16.mxu0 0
        %999 = vmatpush1.bf16.msra.mxu0 0
        %1000 = vmatprep.subr.bf16.mxu0 0
        %1001 = vmatpush1.bf16.msra.mxu0 0
        %1002 = vmatprep.subr.bf16.mxu0 0
        %1003 = vmatpush1.bf16.msra.mxu0 0
        %1004 = vmatprep.mubr.bf16.mxu0 0
        %1005 = vmatmul.mubr.bf16.gmra.mrb[0].mxu0 %v967
        %v1006 = vpop.f32.mrb[0].mxu0
        %v1007 = vadd.f32 0.0, %v1006
        %v1008 = vpop.f32.mrb[0].mxu0
        %v1009 = vpop.f32.mrb[0].mxu0
        %v1010 = vpop.f32.mrb[0].mxu0
        %1011 = vdwg.mxu0
        %v1012 = vrcp.pop %v959
        %v1013 = vmul.f32 %v1007, %v1012
        %v1014 = vpack.c.bf16 %v1013, %v1013
        %v1016 = vunpack.c.l.b16 %v1014
        %v1017 = vpack.c.b16 %v1016, %v1016
        %1018 = vrot.lane.b32.xlu0 %v1017, 8
        %v1019 = vpop.permute.xlu0 %1018
        %vm1021 = vcmask 126016
        %1022 = vst.msk [vmem:[#allocation3] sm:$0xf] %vm1021, %v1019
        %1023 = vrot.lane.b32.xlu0 %v787, 112
        %v1024 = vpop.permute.xlu0 %1023
        %1025 = vrot.lane.b32.xlu0 %v902, 112
        %v1026 = vpop.permute.xlu0 %1025
        %v1028 = vsel %vm788, %v1024, 0
        %v1031 = vsel %vm788, %v1026, 0
        %1033 = vmatprep.subr.bf16.mxu0 0
        %1034 = vmatpush1.bf16.xpose.msra.mxu0 %v1031
        %1035 = vmatprep.subr.bf16.mxu0 0
        %1036 = vmatpush1.bf16.xpose.msra.mxu0 0
        %1037 = vmatprep.subr.bf16.mxu0 0
        %1038 = vmatpush1.bf16.xpose.msra.mxu0 0
        %1039 = vmatprep.subr.bf16.mxu0 0
        %1040 = vmatpush1.bf16.xpose.msra.mxu0 0
        %1041 = vmatprep.subr.bf16.mxu0 0
        %1042 = vmatpush1.bf16.xpose.msra.mxu0 0
        %1043 = vmatprep.subr.bf16.mxu0 0
        %1044 = vmatpush1.bf16.xpose.msra.mxu0 0
        %1045 = vmatprep.subr.bf16.mxu0 0
        %1046 = vmatpush1.bf16.xpose.msra.mxu0 0
        %1047 = vmatprep.subr.bf16.mxu0 0
        %1048 = vmatpush1.bf16.xpose.msra.mxu0 0
        %1049 = vmatprep.subr.bf16.mxu0 0
        %1050 = vmatpush1.bf16.xpose.msra.mxu0 0
        %1051 = vmatprep.subr.bf16.mxu0 0
        %1052 = vmatpush1.bf16.xpose.msra.mxu0 0
        %1053 = vmatprep.subr.bf16.mxu0 0
        %1054 = vmatpush1.bf16.xpose.msra.mxu0 0
        %1055 = vmatprep.subr.bf16.mxu0 0
        %1056 = vmatpush1.bf16.xpose.msra.mxu0 0
        %1057 = vmatprep.subr.bf16.mxu0 0
        %1058 = vmatpush1.bf16.xpose.msra.mxu0 0
        %1059 = vmatprep.subr.bf16.mxu0 0
        %1060 = vmatpush1.bf16.xpose.msra.mxu0 0
        %1061 = vmatprep.subr.bf16.mxu0 0
        %1062 = vmatpush1.bf16.xpose.msra.mxu0 0
        %1063 = vmatprep.subr.bf16.mxu0 0
        %1064 = vmatpush1.bf16.xpose.msra.mxu0 0
        %1065 = vmatprep.mubr.bf16.mxu0 0
        %1066 = vmatmul.mubr.bf16.gmra.mrb[0].mxu0 %v1028
        %v1067 = vpop.f32.mrb[0].mxu0
        %v1068 = vadd.f32 0.0, %v1067
        %v1069 = vpop.f32.mrb[0].mxu0
        %v1070 = vpop.f32.mrb[0].mxu0
        %v1071 = vpop.f32.mrb[0].mxu0
        %1072 = vdwg.mxu0
        %v1073 = vsel %vm788, %v1068, -inf
        %1074 = vmax.xlane.f32.xlu0 %v1073
        %v1075 = vpop.xlane.xlu0 %1074
        %v1076 = vsub.f32 %v1068, %v1075
        %v1077 = vmul.f32 %v1076, 1.442695
        %v1078 = vpow.pop %v1077
        %v1079 = vsel %vm788, %v1078, 0.0
        %1080 = vadd.xlane.f32.xlu0 %v1079
        %v1081 = vpop.xlane.xlu0 %1080
        %v1082 = vpack.c.bf16 %v1078, %v1078
        %1083 = vrot.lane.b32.xlu0 %v963, 112
        %v1084 = vpop.permute.xlu0 %1083
        %v1086 = vsel %vm788, %v1082, 0
        %v1089 = vsel %vm848, %v1084, 0
        %1091 = vmatprep.subr.bf16.mxu0 0
        %1092 = vmatpush1.bf16.msra.mxu0 %v1089
        %1093 = vmatprep.subr.bf16.mxu0 0
        %1094 = vmatpush1.bf16.msra.mxu0 0
        %1095 = vmatprep.subr.bf16.mxu0 0
        %1096 = vmatpush1.bf16.msra.mxu0 0
        %1097 = vmatprep.subr.bf16.mxu0 0
        %1098 = vmatpush1.bf16.msra.mxu0 0
        %1099 = vmatprep.subr.bf16.mxu0 0
        %1100 = vmatpush1.bf16.msra.mxu0 0
        %1101 = vmatprep.subr.bf16.mxu0 0
        %1102 = vmatpush1.bf16.msra.mxu0 0
        %1103 = vmatprep.subr.bf16.mxu0 0
        %1104 = vmatpush1.bf16.msra.mxu0 0
        %1105 = vmatprep.subr.bf16.mxu0 0
        %1106 = vmatpush1.bf16.msra.mxu0 0
        %1107 = vmatprep.subr.bf16.mxu0 0
        %1108 = vmatpush1.bf16.msra.mxu0 0
        %1109 = vmatprep.subr.bf16.mxu0 0
        %1110 = vmatpush1.bf16.msra.mxu0 0
        %1111 = vmatprep.subr.bf16.mxu0 0
        %1112 = vmatpush1.bf16.msra.mxu0 0
        %1113 = vmatprep.subr.bf16.mxu0 0
        %1114 = vmatpush1.bf16.msra.mxu0 0
        %1115 = vmatprep.subr.bf16.mxu0 0
        %1116 = vmatpush1.bf16.msra.mxu0 0
        %1117 = vmatprep.subr.bf16.mxu0 0
        %1118 = vmatpush1.bf16.msra.mxu0 0
        %1119 = vmatprep.subr.bf16.mxu0 0
        %1120 = vmatpush1.bf16.msra.mxu0 0
        %1121 = vmatprep.subr.bf16.mxu0 0
        %1122 = vmatpush1.bf16.msra.mxu0 0
        %1123 = vmatprep.mubr.bf16.mxu0 0
        %1124 = vmatmul.mubr.bf16.gmra.mrb[0].mxu0 %v1086
        %v1125 = vpop.f32.mrb[0].mxu0
        %v1126 = vadd.f32 0.0, %v1125
        %v1127 = vpop.f32.mrb[0].mxu0
        %v1128 = vpop.f32.mrb[0].mxu0
        %v1129 = vpop.f32.mrb[0].mxu0
        %1130 = vdwg.mxu0
        %v1131 = vrcp.pop %v1081
        %v1132 = vmul.f32 %v1126, %v1131
        %v1133 = vpack.c.bf16 %v1132, %v1132
        %v1135 = vunpack.c.l.b16 %v1133
        %v1136 = vpack.c.b16 %v1135, %v1135
        %1137 = vrot.lane.b32.xlu0 %v1136, 16
        %v1138 = vpop.permute.xlu0 %1137
        %vm1140 = vcmask 191616
        %1141 = vst.msk [vmem:[#allocation3] sm:$0xf] %vm1140, %v1138
        %1142 = vrot.lane.b32.xlu0 %v787, 104
        %v1143 = vpop.permute.xlu0 %1142
        %1144 = vrot.lane.b32.xlu0 %v902, 104
        %v1145 = vpop.permute.xlu0 %1144
        %v1147 = vsel %vm788, %v1143, 0
        %v1150 = vsel %vm788, %v1145, 0
        %1152 = vmatprep.subr.bf16.mxu0 0
        %1153 = vmatpush1.bf16.xpose.msra.mxu0 %v1150
        %1154 = vmatprep.subr.bf16.mxu0 0
        %1155 = vmatpush1.bf16.xpose.msra.mxu0 0
        %1156 = vmatprep.subr.bf16.mxu0 0
        %1157 = vmatpush1.bf16.xpose.msra.mxu0 0
        %1158 = vmatprep.subr.bf16.mxu0 0
        %1159 = vmatpush1.bf16.xpose.msra.mxu0 0
        %1160 = vmatprep.subr.bf16.mxu0 0
        %1161 = vmatpush1.bf16.xpose.msra.mxu0 0
        %1162 = vmatprep.subr.bf16.mxu0 0
        %1163 = vmatpush1.bf16.xpose.msra.mxu0 0
        %1164 = vmatprep.subr.bf16.mxu0 0
        %1165 = vmatpush1.bf16.xpose.msra.mxu0 0
        %1166 = vmatprep.subr.bf16.mxu0 0
        %1167 = vmatpush1.bf16.xpose.msra.mxu0 0
        %1168 = vmatprep.subr.bf16.mxu0 0
        %1169 = vmatpush1.bf16.xpose.msra.mxu0 0
        %1170 = vmatprep.subr.bf16.mxu0 0
        %1171 = vmatpush1.bf16.xpose.msra.mxu0 0
        %1172 = vmatprep.subr.bf16.mxu0 0
        %1173 = vmatpush1.bf16.xpose.msra.mxu0 0
        %1174 = vmatprep.subr.bf16.mxu0 0
        %1175 = vmatpush1.bf16.xpose.msra.mxu0 0
        %1176 = vmatprep.subr.bf16.mxu0 0
        %1177 = vmatpush1.bf16.xpose.msra.mxu0 0
        %1178 = vmatprep.subr.bf16.mxu0 0
        %1179 = vmatpush1.bf16.xpose.msra.mxu0 0
        %1180 = vmatprep.subr.bf16.mxu0 0
        %1181 = vmatpush1.bf16.xpose.msra.mxu0 0
        %1182 = vmatprep.subr.bf16.mxu0 0
        %1183 = vmatpush1.bf16.xpose.msra.mxu0 0
        %1184 = vmatprep.mubr.bf16.mxu0 0
        %1185 = vmatmul.mubr.bf16.gmra.mrb[0].mxu0 %v1147
        %v1186 = vpop.f32.mrb[0].mxu0
        %v1187 = vadd.f32 0.0, %v1186
        %v1188 = vpop.f32.mrb[0].mxu0
        %v1189 = vpop.f32.mrb[0].mxu0
        %v1190 = vpop.f32.mrb[0].mxu0
        %1191 = vdwg.mxu0
        %v1192 = vsel %vm788, %v1187, -inf
        %1193 = vmax.xlane.f32.xlu0 %v1192
        %v1194 = vpop.xlane.xlu0 %1193
        %v1195 = vsub.f32 %v1187, %v1194
        %v1196 = vmul.f32 %v1195, 1.442695
        %v1197 = vpow.pop %v1196
        %v1198 = vsel %vm788, %v1197, 0.0
        %1199 = vadd.xlane.f32.xlu0 %v1198
        %v1200 = vpop.xlane.xlu0 %1199
        %v1201 = vpack.c.bf16 %v1197, %v1197
        %1202 = vrot.lane.b32.xlu0 %v963, 104
        %v1203 = vpop.permute.xlu0 %1202
        %v1205 = vsel %vm788, %v1201, 0
        %v1208 = vsel %vm848, %v1203, 0
        %1210 = vmatprep.subr.bf16.mxu0 0
        %1211 = vmatpush1.bf16.msra.mxu0 %v1208
        %1212 = vmatprep.subr.bf16.mxu0 0
        %1213 = vmatpush1.bf16.msra.mxu0 0
        %1214 = vmatprep.subr.bf16.mxu0 0
        %1215 = vmatpush1.bf16.msra.mxu0 0
        %1216 = vmatprep.subr.bf16.mxu0 0
        %1217 = vmatpush1.bf16.msra.mxu0 0
        %1218 = vmatprep.subr.bf16.mxu0 0
        %1219 = vmatpush1.bf16.msra.mxu0 0
        %1220 = vmatprep.subr.bf16.mxu0 0
        %1221 = vmatpush1.bf16.msra.mxu0 0
        %1222 = vmatprep.subr.bf16.mxu0 0
        %1223 = vmatpush1.bf16.msra.mxu0 0
        %1224 = vmatprep.subr.bf16.mxu0 0
        %1225 = vmatpush1.bf16.msra.mxu0 0
        %1226 = vmatprep.subr.bf16.mxu0 0
        %1227 = vmatpush1.bf16.msra.mxu0 0
        %1228 = vmatprep.subr.bf16.mxu0 0
        %1229 = vmatpush1.bf16.msra.mxu0 0
        %1230 = vmatprep.subr.bf16.mxu0 0
        %1231 = vmatpush1.bf16.msra.mxu0 0
        %1232 = vmatprep.subr.bf16.mxu0 0
        %1233 = vmatpush1.bf16.msra.mxu0 0
        %1234 = vmatprep.subr.bf16.mxu0 0
        %1235 = vmatpush1.bf16.msra.mxu0 0
        %1236 = vmatprep.subr.bf16.mxu0 0
        %1237 = vmatpush1.bf16.msra.mxu0 0
        %1238 = vmatprep.subr.bf16.mxu0 0
        %1239 = vmatpush1.bf16.msra.mxu0 0
        %1240 = vmatprep.subr.bf16.mxu0 0
        %1241 = vmatpush1.bf16.msra.mxu0 0
        %1242 = vmatprep.mubr.bf16.mxu0 0
        %1243 = vmatmul.mubr.bf16.gmra.mrb[0].mxu0 %v1205
        %v1244 = vpop.f32.mrb[0].mxu0
        %v1245 = vadd.f32 0.0, %v1244
        %v1246 = vpop.f32.mrb[0].mxu0
        %v1247 = vpop.f32.mrb[0].mxu0
        %v1248 = vpop.f32.mrb[0].mxu0
        %1249 = vdwg.mxu0
        %v1250 = vrcp.pop %v1200
        %v1251 = vmul.f32 %v1245, %v1250
        %v1252 = vpack.c.bf16 %v1251, %v1251
        %v1254 = vunpack.c.l.b16 %v1252
        %v1255 = vpack.c.b16 %v1254, %v1254
        %1256 = vrot.lane.b32.xlu0 %v1255, 24
        %v1257 = vpop.permute.xlu0 %1256
        %vm1259 = vcmask 257216
        %1260 = vst.msk [vmem:[#allocation3] sm:$0xf] %vm1259, %v1257
        %v1261 = vld [vmem:[#allocation3] sm:$0xf]
        %v1262 = vld [vmem:[#allocation7] sm:$0xf]
        %v1263 = vld [vmem:[#allocation7 + $0x4] sm:$0xf]
        %v1264 = vld [vmem:[#allocation7 + $0x8] sm:$0xf]
        %v1265 = vld [vmem:[#allocation7 + $0xc] sm:$0xf]
        %v1266 = vld [vmem:[#allocation9] sm:$0x1]
        %v1268 = vlaneseq
        %v1269 = vshrl.u32 %v1268, 7
        %v1270 = vsub.s32 0, %v1269
        %v1271 = vrot.slane %v1266, %v1270
        %v1277 = vunpack.c.l.b16 %v1262
        %v1278 = vunpack.c.l.b16 %v1263
        %v1279 = vunpack.c.l.b16 %v1264
        %v1280 = vunpack.c.l.b16 %v1265
        %v1281 = vpack.c.b16 %v1278, %v1277
        %v1282 = vpack.c.b16 %v1280, %v1279
        %v1286 = vsel %vm740, %v1261, 0
        %1288 = vmatprep.subr.bf16.mxu0 0
        %1289 = vmatpush1.bf16.msra.mxu0 %v1281
        %1290 = vmatprep.subr.bf16.mxu0 0
        %1291 = vmatpush1.bf16.msra.mxu0 %v1282
        %1292 = vmatprep.subr.bf16.mxu0 0
        %1293 = vmatpush1.bf16.msra.mxu0 0
        %1294 = vmatprep.subr.bf16.mxu0 0
        %1295 = vmatpush1.bf16.msra.mxu0 0
        %1296 = vmatprep.subr.bf16.mxu0 0
        %1297 = vmatpush1.bf16.msra.mxu0 0
        %1298 = vmatprep.subr.bf16.mxu0 0
        %1299 = vmatpush1.bf16.msra.mxu0 0
        %1300 = vmatprep.subr.bf16.mxu0 0
        %1301 = vmatpush1.bf16.msra.mxu0 0
        %1302 = vmatprep.subr.bf16.mxu0 0
        %1303 = vmatpush1.bf16.msra.mxu0 0
        %1304 = vmatprep.subr.bf16.mxu0 0
        %1305 = vmatpush1.bf16.msra.mxu0 0
        %1306 = vmatprep.subr.bf16.mxu0 0
        %1307 = vmatpush1.bf16.msra.mxu0 0
        %1308 = vmatprep.subr.bf16.mxu0 0
        %1309 = vmatpush1.bf16.msra.mxu0 0
        %1310 = vmatprep.subr.bf16.mxu0 0
        %1311 = vmatpush1.bf16.msra.mxu0 0
        %1312 = vmatprep.subr.bf16.mxu0 0
        %1313 = vmatpush1.bf16.msra.mxu0 0
        %1314 = vmatprep.subr.bf16.mxu0 0
        %1315 = vmatpush1.bf16.msra.mxu0 0
        %1316 = vmatprep.subr.bf16.mxu0 0
        %1317 = vmatpush1.bf16.msra.mxu0 0
        %1318 = vmatprep.subr.bf16.mxu0 0
        %1319 = vmatpush1.bf16.msra.mxu0 0
        %1320 = vmatprep.mubr.bf16.mxu0 0
        %1321 = vmatmul.mubr.bf16.gmra.mrb[0].mxu0 %v1286
        %v1322 = vpop.f32.mrb[0].mxu0
        %v1323 = vadd.f32 %v1271, %v1322
        %v1324 = vpop.f32.mrb[0].mxu0
        %v1325 = vpop.f32.mrb[0].mxu0
        %v1326 = vpop.f32.mrb[0].mxu0
        %1327 = vdwg.mxu0
        %v1328 = vadd.f32 %v715, %v1323
        %v1329 = vsel %vm740, %v1328, 0.0
        %1330 = vadd.xlane.f32.xlu0 %v1329
        %v1331 = vpop.xlane.xlu0 %1330
        %v1332 = vrcp.pop 32.0
        %v1333 = vmul.f32 %v1331, %v1332
        %v1334 = vmul.f32 %v1328, %v1328
        %v1335 = vsel %vm740, %v1334, 0.0
        %1336 = vadd.xlane.f32.xlu0 %v1335
        %v1337 = vpop.xlane.xlu0 %1336
        %v1338 = vmul.f32 %v1337, %v1332
        %v1339 = vmul.f32 %v1333, %v1333
        %v1340 = vsub.f32 %v1338, %v1339
        %v1341 = vmax.f32 %v1340, 0.0
        %v1342 = vsub.f32 %v1328, %v1333
        %v1343 = vadd.f32 %v1341, 1e-05
        %v1344 = vrsqrt.pop %v1343
        %v1345 = vmul.f32 %v1342, %v1344
        %v1346 = vld [vmem:[#allocation10] sm:$0x1]
        %v1348 = vlaneseq
        %v1349 = vshrl.u32 %v1348, 7
        %v1350 = vsub.s32 0, %v1349
        %v1351 = vrot.slane %v1346, %v1350
        %v1353 = vmul.f32 %v1345, %v1351
        %v1354 = vld [vmem:[#allocation12] sm:$0x1]
        %v1356 = vlaneseq
        %v1357 = vshrl.u32 %v1356, 7
        %v1358 = vsub.s32 0, %v1357
        %v1359 = vrot.slane %v1354, %v1358
        %v1361 = vadd.f32 %v1353, %v1359
        %v1362 = vpack.c.bf16 %v1361, %v1361
        %v1363 = vld [vmem:[%s10] sm:$0xf]
        %v1364 = vld [vmem:[%s10 + $0x4] sm:$0xf]
        %v1365 = vld [vmem:[%s10 + $0x8] sm:$0xf]
        %v1366 = vld [vmem:[%s10 + $0xc] sm:$0xf]
        %v1367 = vld [vmem:[%s11] sm:$0x1]
        %v1369 = vlaneseq
        %v1370 = vshrl.u32 %v1369, 7
        %v1371 = vsub.s32 0, %v1370
        %v1372 = vrot.slane %v1367, %v1371
        %v1378 = vunpack.c.l.b16 %v1363
        %v1379 = vunpack.c.l.b16 %v1364
        %v1380 = vunpack.c.l.b16 %v1365
        %v1381 = vunpack.c.l.b16 %v1366
        %v1382 = vpack.c.b16 %v1379, %v1378
        %v1383 = vpack.c.b16 %v1381, %v1380
        %v1387 = vsel %vm740, %v1362, 0
        %1389 = vmatprep.subr.bf16.mxu0 0
        %1390 = vmatpush1.bf16.msra.mxu0 %v1382
        %1391 = vmatprep.subr.bf16.mxu0 0
        %1392 = vmatpush1.bf16.msra.mxu0 %v1383
        %1393 = vmatprep.subr.bf16.mxu0 0
        %1394 = vmatpush1.bf16.msra.mxu0 0
        %1395 = vmatprep.subr.bf16.mxu0 0
        %1396 = vmatpush1.bf16.msra.mxu0 0
        %1397 = vmatprep.subr.bf16.mxu0 0
        %1398 = vmatpush1.bf16.msra.mxu0 0
        %1399 = vmatprep.subr.bf16.mxu0 0
        %1400 = vmatpush1.bf16.msra.mxu0 0
        %1401 = vmatprep.subr.bf16.mxu0 0
        %1402 = vmatpush1.bf16.msra.mxu0 0
        %1403 = vmatprep.subr.bf16.mxu0 0
        %1404 = vmatpush1.bf16.msra.mxu0 0
        %1405 = vmatprep.subr.bf16.mxu0 0
        %1406 = vmatpush1.bf16.msra.mxu0 0
        %1407 = vmatprep.subr.bf16.mxu0 0
        %1408 = vmatpush1.bf16.msra.mxu0 0
        %1409 = vmatprep.subr.bf16.mxu0 0
        %1410 = vmatpush1.bf16.msra.mxu0 0
        %1411 = vmatprep.subr.bf16.mxu0 0
        %1412 = vmatpush1.bf16.msra.mxu0 0
        %1413 = vmatprep.subr.bf16.mxu0 0
        %1414 = vmatpush1.bf16.msra.mxu0 0
        %1415 = vmatprep.subr.bf16.mxu0 0
        %1416 = vmatpush1.bf16.msra.mxu0 0
        %1417 = vmatprep.subr.bf16.mxu0 0
        %1418 = vmatpush1.bf16.msra.mxu0 0
        %1419 = vmatprep.subr.bf16.mxu0 0
        %1420 = vmatpush1.bf16.msra.mxu0 0
        %1421 = vmatprep.mubr.bf16.mxu0 0
        %1422 = vmatmul.mubr.bf16.gmra.mrb[0].mxu0 %v1387
        %v1423 = vpop.f32.mrb[0].mxu0
        %v1424 = vadd.f32 %v1372, %v1423
        %v1425 = vpop.f32.mrb[0].mxu0
        %v1426 = vpop.f32.mrb[0].mxu0
        %v1427 = vpop.f32.mrb[0].mxu0
        %1428 = vdwg.mxu0
        %v1429 = vmax.f32 %v1424, 0.0
        %v1430 = vpack.c.bf16 %v1429, %v1429
        %v1431 = vld [vmem:[%s12] sm:$0xf]
        %v1432 = vld [vmem:[%s12 + $0x4] sm:$0xf]
        %v1433 = vld [vmem:[%s12 + $0x8] sm:$0xf]
        %v1434 = vld [vmem:[%s12 + $0xc] sm:$0xf]
        %v1435 = vld [vmem:[%s12 + $0x10] sm:$0xf]
        %v1436 = vld [vmem:[%s12 + $0x14] sm:$0xf]
        %v1437 = vld [vmem:[%s12 + $0x18] sm:$0xf]
        %v1438 = vld [vmem:[%s12 + $0x1c] sm:$0xf]
        %v1439 = vld [vmem:[%s13] sm:$0x1]
        %v1441 = vlaneseq
        %v1442 = vshrl.u32 %v1441, 7
        %v1443 = vsub.s32 0, %v1442
        %v1444 = vrot.slane %v1439, %v1443
        %v1454 = vunpack.c.l.b16 %v1431
        %v1455 = vunpack.c.l.b16 %v1432
        %v1456 = vunpack.c.l.b16 %v1433
        %v1457 = vunpack.c.l.b16 %v1434
        %v1458 = vunpack.c.l.b16 %v1435
        %v1459 = vunpack.c.l.b16 %v1436
        %v1460 = vunpack.c.l.b16 %v1437
        %v1461 = vunpack.c.l.b16 %v1438
        %v1462 = vpack.c.b16 %v1455, %v1454
        %v1463 = vpack.c.b16 %v1457, %v1456
        %v1464 = vpack.c.b16 %v1459, %v1458
        %v1465 = vpack.c.b16 %v1461, %v1460
        %vm1470 = vcmask 523264
        %v1472 = vsel %vm1470, %v1430, 0
        %1474 = vmatprep.subr.bf16.mxu0 0
        %1475 = vmatpush1.bf16.msra.mxu0 %v1462
        %1476 = vmatprep.subr.bf16.mxu0 0
        %1477 = vmatpush1.bf16.msra.mxu0 %v1463
        %1478 = vmatprep.subr.bf16.mxu0 0
        %1479 = vmatpush1.bf16.msra.mxu0 %v1464
        %1480 = vmatprep.subr.bf16.mxu0 0
        %1481 = vmatpush1.bf16.msra.mxu0 %v1465
        %1482 = vmatprep.subr.bf16.mxu0 0
        %1483 = vmatpush1.bf16.msra.mxu0 0
        %1484 = vmatprep.subr.bf16.mxu0 0
        %1485 = vmatpush1.bf16.msra.mxu0 0
        %1486 = vmatprep.subr.bf16.mxu0 0
        %1487 = vmatpush1.bf16.msra.mxu0 0
        %1488 = vmatprep.subr.bf16.mxu0 0
        %1489 = vmatpush1.bf16.msra.mxu0 0
        %1490 = vmatprep.subr.bf16.mxu0 0
        %1491 = vmatpush1.bf16.msra.mxu0 0
        %1492 = vmatprep.subr.bf16.mxu0 0
        %1493 = vmatpush1.bf16.msra.mxu0 0
        %1494 = vmatprep.subr.bf16.mxu0 0
        %1495 = vmatpush1.bf16.msra.mxu0 0
        %1496 = vmatprep.subr.bf16.mxu0 0
        %1497 = vmatpush1.bf16.msra.mxu0 0
        %1498 = vmatprep.subr.bf16.mxu0 0
        %1499 = vmatpush1.bf16.msra.mxu0 0
        %1500 = vmatprep.subr.bf16.mxu0 0
        %1501 = vmatpush1.bf16.msra.mxu0 0
        %1502 = vmatprep.subr.bf16.mxu0 0
        %1503 = vmatpush1.bf16.msra.mxu0 0
        %1504 = vmatprep.subr.bf16.mxu0 0
        %1505 = vmatpush1.bf16.msra.mxu0 0
        %1506 = vmatprep.mubr.bf16.mxu0 0
        %1507 = vmatmul.mubr.bf16.gmra.mrb[0].mxu0 %v1472
        %v1508 = vpop.f32.mrb[0].mxu0
        %v1509 = vadd.f32 %v1444, %v1508
        %v1510 = vpop.f32.mrb[0].mxu0
        %v1511 = vpop.f32.mrb[0].mxu0
        %v1512 = vpop.f32.mrb[0].mxu0
        %1513 = vdwg.mxu0
        %v1514 = vadd.f32 %v1361, %v1509
        %v1515 = vsel %vm740, %v1514, 0.0
        %1516 = vadd.xlane.f32.xlu0 %v1515
        %v1517 = vpop.xlane.xlu0 %1516
        %v1518 = vmul.f32 %v1517, %v1332
        %v1519 = vmul.f32 %v1514, %v1514
        %v1520 = vsel %vm740, %v1519, 0.0
        %1521 = vadd.xlane.f32.xlu0 %v1520
        %v1522 = vpop.xlane.xlu0 %1521
        %v1523 = vmul.f32 %v1522, %v1332
        %v1524 = vmul.f32 %v1518, %v1518
        %v1525 = vsub.f32 %v1523, %v1524
        %v1526 = vmax.f32 %v1525, 0.0
        %v1527 = vsub.f32 %v1514, %v1518
        %v1528 = vadd.f32 %v1526, 1e-05
        %v1529 = vrsqrt.pop %v1528
        %v1530 = vmul.f32 %v1527, %v1529
        %v1531 = vld [vmem:[%s14] sm:$0x1]
        %v1533 = vlaneseq
        %v1534 = vshrl.u32 %v1533, 7
        %v1535 = vsub.s32 0, %v1534
        %v1536 = vrot.slane %v1531, %v1535
        %v1538 = vmul.f32 %v1530, %v1536
        %v1539 = vld [vmem:[%s15] sm:$0x1]
        %v1541 = vlaneseq
        %v1542 = vshrl.u32 %v1541, 7
        %v1543 = vsub.s32 0, %v1542
        %v1544 = vrot.slane %v1539, %v1543
        %v1546 = vadd.f32 %v1538, %v1544
        %1547 = vst.msk [vmem:[%s623] sm:$0xff] %vm740, %v1546
        %s1548 = sand.u32 %s405, 1
        %s1549 = scalar_lea.sflag [#allocation6], %s1548
        %s1550 = sand.u32 %s405, 1
        %s1551 = smul.addr %s1550, 8
        %s1552 = scalar_lea.vmem [#allocation13], %s1551
        // Predicated region
        $region109: #{tpu_custom_call.1} parent=83 // pred_check
          %p1553 = pneg %p415
        $region110: #{tpu_custom_call.1} parent=83 // pred_check_branch
          %1555 = sbr.rel (%p1553) target = $region112
        $region111: #{tpu_custom_call.1} parent=83 // pred_region
          %s1557 = ssub.s32 128, 128
          %1558 = vsyncadd %s1549, %s1557
          %s1559 = sadd.s32 %s40, %s39
          %s1560 = smul.addr %s1559, 128
          %s1561 = scalar_lea.hbm %s16, %s1560
          %s1563 = sshll.u32 %s1552, 4
          %s1564 = int_to_ptr.vmem [resolvable:$true] %s1563
          %1566 = dma.vmem_to_hbm [thread:$0]  %s1564, 128, %s1561, %s1549
        $region112: #{tpu_custom_call.1} parent=83 // pred_fallthru
          _
      $region84: #{tpu_custom_call.1} parent=5 // pred_fallthru
        _
      %p1567 = scmp.le.s32.totalorder 2, %s30
      // Predicated region
      $region113: #{tpu_custom_call.1} parent=5 // pred_check
        %p1568 = pneg %p1567
      $region114: #{tpu_custom_call.1} parent=5 // pred_check_branch
        %1570 = sbr.rel (%p1568) target = $region116
      $region115: #{tpu_custom_call.1} parent=5 // pred_region
        %s1571 = ssub.s32 %s30, 2
        // Predicated region
        $region117: #{tpu_custom_call.1} parent=115 // pred_check
          %p1572 = pneg %p421
        $region118: #{tpu_custom_call.1} parent=115 // pred_check_branch
          %1574 = sbr.rel (%p1572) target = $region120
        $region119: #{tpu_custom_call.1} parent=115 // pred_region
          %s1575 = sand.u32 %s406, 1
          %s1576 = scalar_lea.sflag [#allocation6], %s1575
          %s1577 = sand.u32 %s406, 1
          %s1578 = smul.addr %s1577, 8
          %s1579 = scalar_lea.vmem [#allocation13], %s1578
          %1580 = dma.done %s1576, 128
        $region120: #{tpu_custom_call.1} parent=115 // pred_fallthru
          _
      $region116: #{tpu_custom_call.1} parent=5 // pred_fallthru
        _
    $region6: #{tpu_custom_call.1} parent=1 // loop_footer
      %s34 = sadd.s32 1, %s30
    $region7: #{tpu_custom_call.1} parent=1 // loop_footer_branch
      %29 = sbr.rel target = $region3
    $region8: #{tpu_custom_call.1} parent=1 // loop_exit
      _
    %1581 = vsyncpa [#allocation5], 1
    %s1582 = scalar_lea.sflag [#allocation5], 1
    %1583 = vsyncpa %s1582, 1
    %1584 = vsyncpa [#allocation8], 1
    %1585 = vsyncpa [#allocation11], 1
    %1586 = vsyncpa [#allocation6], 1
    %s1587 = scalar_lea.sflag [#allocation6], 1
    %1588 = vsyncpa %s1587, 1

</llo_original>
